<compile_context>
chip_gen: v6e
topology: v6e:2x2x1
jax: 0.10.0
libtpu: 0.0.40
codegen_flags: <defaults>
</compile_context>

<pallas_src>
import functools

import jax
import jax.numpy as jnp
from jax.experimental import pallas as pl
from jax.experimental.pallas import tpu as pltpu


# ----------------------------------------------------------------------------
# Kernel: one (batch block, layer) step of the transformer stack.
# ----------------------------------------------------------------------------
def _transformer_kernel(x_ref,
                        ln1w_ref, ln1b_ref,
                        wq_ref, wk_ref, wv_ref, wo_ref, bo_ref,
                        ln2w_ref, ln2b_ref,
                        w1_ref, b1_ref, w2_ref, b2_ref,
                        o_ref,
                        res_ref,
                        *, tb, n, heads, dim_head, eps):
    rows = tb * n
    inner = heads * dim_head
    mdtype = wq_ref.dtype                    # MXU operand dtype (bf16 weights on host)
    l = pl.program_id(1)
    last_l = pl.num_programs(1) - 1

    # Layer 0: load the residual stream (f32) from the input block.
    @pl.when(l == 0)
    def _():
        res_ref[...] = x_ref[...].astype(jnp.float32)

    x = res_ref[...]                                         # (rows, dim) f32

    def layer_norm(h, w_ref, b_ref):
        w = w_ref[0].astype(jnp.float32)                     # (1, dim)
        b = b_ref[0].astype(jnp.float32)                     # (1, dim)
        mu = jnp.mean(h, axis=-1, keepdims=True)
        hc = h - mu
        var = jnp.mean(hc * hc, axis=-1, keepdims=True)
        return hc * jax.lax.rsqrt(var + eps) * w + b

    def split_heads(t):
        # (rows, inner) -> (tb*heads, n, dim_head): one transpose, then clean
        # batched matmuls (batch dim leading, contraction last).
        t = t.reshape(tb, n, heads, dim_head)
        t = jnp.transpose(t, (0, 2, 1, 3))
        return t.reshape(tb * heads, n, dim_head)

    # ----------------- PreNorm + Attention + residual -----------------
    h = layer_norm(x, ln1w_ref, ln1b_ref).astype(mdtype)     # (rows, dim) bf16

    # Wq is pre-scaled by dim_head**-0.5 on the host.
    q = jnp.dot(h, wq_ref[0], preferred_element_type=jnp.float32)   # (rows, inner)
    k = jnp.dot(h, wk_ref[0], preferred_element_type=jnp.float32)
    v = jnp.dot(h, wv_ref[0], preferred_element_type=jnp.float32)

    # bf16 operands for the attention matmuls (full-rate MXU on v5e/v6e/v7x).
    qh = split_heads(q).astype(mdtype)                       # (tb*h, n, d)
    kh = split_heads(k).astype(mdtype)
    vh = split_heads(v).astype(mdtype)

    dots = jax.lax.dot_general(                              # (tb*h, n, n) f32
        qh, kh, (((2,), (2,)), ((0,), (0,))),
        preferred_element_type=jnp.float32)

    m = jnp.max(dots, axis=-1, keepdims=True)
    e = jnp.exp(dots - m)
    attn = e * pl.reciprocal(jnp.sum(e, axis=-1, keepdims=True), approx=False)
    attn = attn.astype(mdtype)

    ctx = jax.lax.dot_general(                               # (tb*h, n, d) f32
        attn, vh, (((2,), (1,)), ((0,), (0,))),
        preferred_element_type=jnp.float32)
    ctx = jnp.transpose(ctx.reshape(tb, heads, n, dim_head), (0, 2, 1, 3))
    ctx = ctx.reshape(rows, inner).astype(mdtype)

    attn_out = (jnp.dot(ctx, wo_ref[0], preferred_element_type=jnp.float32)
                + bo_ref[0].astype(jnp.float32))
    x = x + attn_out

    # ------------- PreNorm + FeedForward (SiLU MLP) + residual -------------
    h = layer_norm(x, ln2w_ref, ln2b_ref).astype(mdtype)
    ff = (jnp.dot(h, w1_ref[0], preferred_element_type=jnp.float32)
          + b1_ref[0].astype(jnp.float32))
    ff = ff * jax.nn.sigmoid(ff)                             # SiLU in f32 (EUP)
    ff = ff.astype(mdtype)
    ff = (jnp.dot(ff, w2_ref[0], preferred_element_type=jnp.float32)
          + b2_ref[0].astype(jnp.float32))
    x = x + ff

    # NOTE: Dropout(p=0.0) in the reference module is the identity -> omitted.

    res_ref[...] = x

    @pl.when(l == last_l)
    def _():
        o_ref[...] = x.astype(o_ref.dtype)


# ----------------------------------------------------------------------------
# Wrapper
# ----------------------------------------------------------------------------
def _pick_tb(B, n, target_rows):
    """Sequences per batch block: sublane-aligned rows, <= target_rows, and at least
    4 batch steps when possible (>= 2 steps per TensorCore under megacore)."""
    cands = [t for t in range(1, B + 1)
             if B % t == 0 and ((t * n) % 8 == 0 or t == B)]
    fit = [t for t in cands if t * n <= target_rows] or [min(cands)]
    for min_steps in (4, 2, 1):
        ok = [t for t in fit if B // t >= min_steps]
        if ok:
            return max(ok)
    return max(fit)


def transformer_forward(x, params, *, heads, dim_head, compute_dtype=jnp.bfloat16):
    """x: (b, p, n, dim).  Returns (b, p, n, dim)."""
    b, p, n, dim = x.shape
    depth = params["ln1_w"].shape[0]
    inner = heads * dim_head
    mlp_dim = params["w1"].shape[-1]
    scale = float(dim_head) ** -0.5

    B = b * p
    R = B * n
    xf = x.reshape(R, dim)

    # Per-generation VMEM budgeting (v7x: 64 MiB physical -> ~48 MiB; v5e/v6e: 128 MiB).
    try:
        vmem_cap = pltpu.get_tpu_info().vmem_capacity_bytes
    except Exception:
        vmem_cap = 64 * 1024 * 1024
    vmem_limit = int(min(0.75 * vmem_cap, 100 * 1024 * 1024))
    target_rows = 1024 if vmem_cap >= (100 << 20) else 512

    tb = _pick_tb(B, n, target_rows)
    rows_blk = tb * n
    grid = (B // tb, depth)

    cd = compute_dtype
    # Fold softmax scale into Wq (free); keep Wq/Wk/Wv split (lane-aligned matmuls);
    # large weight matrices in bf16 (half the DMA/VMEM), LN params & biases stay f32.
    weights = (
        params["ln1_w"], params["ln1_b"],
        (params["wq"] * scale).astype(cd), params["wk"].astype(cd),
        params["wv"].astype(cd),
        params["wo"].astype(cd), params["bo"],
        params["ln2_w"], params["ln2_b"],
        params["w1"].astype(cd), params["b1"],
        params["w2"].astype(cd), params["b2"],
    )

    kernel = functools.partial(
        _transformer_kernel, tb=tb, n=n, heads=heads, dim_head=dim_head, eps=1e-5)

    def layer_spec(arr):
        # (depth, ...) array: stream one layer's slab per depth-grid step.
        blk = (1,) + arr.shape[1:]
        nd = arr.ndim
        return pl.BlockSpec(blk, lambda i, l, _nd=nd: (l,) + (0,) * (_nd - 1))

    in_specs = ([pl.BlockSpec((rows_blk, dim), lambda i, l: (i, 0))]
                + [layer_spec(w) for w in weights])
    out_specs = pl.BlockSpec((rows_blk, dim), lambda i, l: (i, 0))

    # Advisory cost estimate for XLA scheduling around the custom call.
    per_layer_flops = (3 * 2 * R * dim * inner          # q,k,v projections
                       + 2 * R * n * inner              # q @ k^T
                       + 2 * R * n * inner              # attn @ v
                       + 2 * R * inner * dim            # output projection
                       + 2 * 2 * R * dim * mlp_dim      # MLP linears
                       + 12 * R * dim)                  # LN / residual / softmax ew
    per_layer_transc = R * heads * n + R * mlp_dim + 2 * R
    num_batch_blocks = B // tb
    bytes_x = 2 * R * dim * jnp.dtype(x.dtype).itemsize
    bytes_w = sum(int(w.size) * jnp.dtype(w.dtype).itemsize for w in weights)
    cost = pl.CostEstimate(flops=int(depth * per_layer_flops),
                           transcendentals=int(depth * per_layer_transc),
                           bytes_accessed=int(bytes_x + bytes_w * num_batch_blocks))

    out = pl.pallas_call(
        kernel,
        out_shape=jax.ShapeDtypeStruct((R, dim), x.dtype),
        grid_spec=pltpu.PrefetchScalarGridSpec(
            num_scalar_prefetch=0,
            grid=grid,
            in_specs=in_specs,
            out_specs=out_specs,
            scratch_shapes=[pltpu.VMEM((rows_blk, dim), jnp.float32)],
        ),
        compiler_params=pltpu.CompilerParams(
            dimension_semantics=("parallel", "arbitrary"),
            vmem_limit_bytes=vmem_limit,
        ),
        cost_estimate=cost,
    )(xf, *weights)

    return out.reshape(b, p, n, dim)


# ----------------------------------------------------------------------------
# Pure-JAX reference mirroring the PyTorch forward (f32 everywhere)
# ----------------------------------------------------------------------------
def transformer_reference(x, params, *, heads, dim_head):
    b, p, n, dim = x.shape
    depth = params["ln1_w"].shape[0]
    inner = heads * dim_head
    scale = float(dim_head) ** -0.5
    eps = 1e-5

    def ln(h, w, b_):
        mu = jnp.mean(h, axis=-1, keepdims=True)
        var = jnp.mean((h - mu) ** 2, axis=-1, keepdims=True)
        return (h - mu) / jnp.sqrt(var + eps) * w + b_

    def heads_split(t):  # 'b p n (h d) -> b p h n d'
        return t.reshape(b, p, n, heads, dim_head).transpose(0, 1, 3, 2, 4)

    for l in range(depth):
        h = ln(x, params["ln1_w"][l, 0], params["ln1_b"][l, 0])
        q = heads_split(h @ params["wq"][l])
        k = heads_split(h @ params["wk"][l])
        v = heads_split(h @ params["wv"][l])
        dots = jnp.einsum("bphnd,bphmd->bphnm", q, k) * scale
        attn = jax.nn.softmax(dots, axis=-1)
        out = jnp.einsum("bphnm,bphmd->bphnd", attn, v)
        out = out.transpose(0, 1, 3, 2, 4).reshape(b, p, n, inner)
        x = x + out @ params["wo"][l] + params["bo"][l, 0]

        h = ln(x, params["ln2_w"][l, 0], params["ln2_b"][l, 0])
        ff = jax.nn.silu(h @ params["w1"][l] + params["b1"][l, 0])
        ff = ff @ params["w2"][l] + params["b2"][l, 0]
        x = x + ff
    return x


# ----------------------------------------------------------------------------
# Main
# ----------------------------------------------------------------------------
def init_params(key, *, depth, dim, heads, dim_head, mlp_dim, dtype=jnp.float32):
    inner = heads * dim_head
    ks = jax.random.split(key, 14)

    def rnd(k, shape, fan_in):
        return jax.random.normal(k, shape, dtype) * (1.0 / jnp.sqrt(fan_in))

    return dict(
        ln1_w=1.0 + 0.05 * jax.random.normal(ks[0], (depth, 1, dim), dtype),
        ln1_b=0.05 * jax.random.normal(ks[1], (depth, 1, dim), dtype),
        wq=rnd(ks[2], (depth, dim, inner), dim),
        wk=rnd(ks[3], (depth, dim, inner), dim),
        wv=rnd(ks[4], (depth, dim, inner), dim),
        wo=rnd(ks[5], (depth, inner, dim), inner),
        bo=0.02 * jax.random.normal(ks[6], (depth, 1, dim), dtype),
        ln2_w=1.0 + 0.05 * jax.random.normal(ks[7], (depth, 1, dim), dtype),
        ln2_b=0.05 * jax.random.normal(ks[8], (depth, 1, dim), dtype),
        w1=rnd(ks[9], (depth, dim, mlp_dim), dim),
        b1=0.02 * jax.random.normal(ks[10], (depth, 1, mlp_dim), dtype),
        w2=rnd(ks[11], (depth, mlp_dim, dim), mlp_dim),
        b2=0.02 * jax.random.normal(ks[12], (depth, 1, dim), dtype),
    )


if __name__ == "__main__":
    # Small shapes consistent with the module's forward (b, p, n, dim).
    b, p, n, dim = 2, 2, 8, 32
    heads, dim_head = 4, 8
    mlp_dim = 64
    depth = 2

    key = jax.random.PRNGKey(0)
    kx, kp = jax.random.split(key)
    x = jax.random.normal(kx, (b, p, n, dim), dtype=jnp.float32)
    params = init_params(kp, depth=depth, dim=dim, heads=heads,
                         dim_head=dim_head, mlp_dim=mlp_dim)

    y = transformer_forward(x, params, heads=heads, dim_head=dim_head)
    y = jax.block_until_ready(y)

    y_ref = transformer_reference(x, params, heads=heads, dim_head=dim_head)
    assert y.shape == (b, p, n, dim)
    # Tolerance accounts for bf16 MXU operands (weights + activations) in the kernel
    # vs. the all-f32 reference; softmax reciprocal is exact (approx=False).
    assert jnp.allclose(y, y_ref, atol=3e-2, rtol=3e-2), "mismatch vs reference"

    print("KERNEL_OK")
</pallas_src>

<mosaic_0001>
module attributes {stable_mosaic.version = 11 : i64} {
  func.func @_transformer_kernel(%arg0: i32, %arg1: i32, %arg2: memref<8x32xf32, #tpu.memory_space<vmem>>, %arg3: memref<1x1x32xf32, #tpu.memory_space<vmem>>, %arg4: memref<1x1x32xf32, #tpu.memory_space<vmem>>, %arg5: memref<1x32x32xbf16, #tpu.memory_space<vmem>>, %arg6: memref<1x32x32xbf16, #tpu.memory_space<vmem>>, %arg7: memref<1x32x32xbf16, #tpu.memory_space<vmem>>, %arg8: memref<1x32x32xbf16, #tpu.memory_space<vmem>>, %arg9: memref<1x1x32xf32, #tpu.memory_space<vmem>>, %arg10: memref<1x1x32xf32, #tpu.memory_space<vmem>>, %arg11: memref<1x1x32xf32, #tpu.memory_space<vmem>>, %arg12: memref<1x32x64xbf16, #tpu.memory_space<vmem>>, %arg13: memref<1x1x64xf32, #tpu.memory_space<vmem>>, %arg14: memref<1x64x32xbf16, #tpu.memory_space<vmem>>, %arg15: memref<1x1x32xf32, #tpu.memory_space<vmem>>, %arg16: memref<8x32xf32, #tpu.memory_space<vmem>>, %arg17: memref<8x32xf32, #tpu.memory_space<vmem>>) attributes {dimension_semantics = [#tpu.dimension_semantics<parallel>, #tpu.dimension_semantics<arbitrary>], iteration_bounds = array<i64: 4, 2>, scalar_prefetch = 0 : i64, scratch_operands = 1 : i64, tpu.core_type = #tpu.core_type<tc>, window_params = [{transform_indices = @transform_0, window_bounds = array<i64: 8, 32>}, {transform_indices = @transform_1, window_bounds = array<i64: 1, 1, 32>}, {transform_indices = @transform_2, window_bounds = array<i64: 1, 1, 32>}, {transform_indices = @transform_3, window_bounds = array<i64: 1, 32, 32>}, {transform_indices = @transform_4, window_bounds = array<i64: 1, 32, 32>}, {transform_indices = @transform_5, window_bounds = array<i64: 1, 32, 32>}, {transform_indices = @transform_6, window_bounds = array<i64: 1, 32, 32>}, {transform_indices = @transform_7, window_bounds = array<i64: 1, 1, 32>}, {transform_indices = @transform_8, window_bounds = array<i64: 1, 1, 32>}, {transform_indices = @transform_9, window_bounds = array<i64: 1, 1, 32>}, {transform_indices = @transform_10, window_bounds = array<i64: 1, 32, 64>}, {transform_indices = @transform_11, window_bounds = array<i64: 1, 1, 64>}, {transform_indices = @transform_12, window_bounds = array<i64: 1, 64, 32>}, {transform_indices = @transform_13, window_bounds = array<i64: 1, 1, 32>}, {transform_indices = @transform_14, window_bounds = array<i64: 8, 32>}]} {
    %c0_i32 = arith.constant 0 : i32
    %0 = arith.cmpi eq, %arg1, %c0_i32 : i32
    %1 = arith.extui %0 : i1 to i32
    %c0_i32_0 = arith.constant 0 : i32
    %2 = arith.cmpi ne, %1, %c0_i32_0 : i32
    scf.if %2 {
      %c0_64 = arith.constant 0 : index
      %c0_65 = arith.constant 0 : index
      %126 = vector.load %arg2[%c0_64, %c0_65] : memref<8x32xf32, #tpu.memory_space<vmem>>, vector<8x32xf32>
      %c0_66 = arith.constant 0 : index
      %c0_67 = arith.constant 0 : index
      %127 = vector.load %arg17[%c0_66, %c0_67] : memref<8x32xf32, #tpu.memory_space<vmem>>, vector<8x32xf32>
      tpu.vector_store %arg17[%c0_66, %c0_67], %126 {strides = array<i32>} : memref<8x32xf32, #tpu.memory_space<vmem>>, vector<8x32xf32>,
    } else {
    }
    %c0 = arith.constant 0 : index
    %c0_1 = arith.constant 0 : index
    %3 = vector.load %arg17[%c0, %c0_1] : memref<8x32xf32, #tpu.memory_space<vmem>>, vector<8x32xf32>
    %c0_2 = arith.constant 0 : index
    %c0_3 = arith.constant 0 : index
    %c0_4 = arith.constant 0 : index
    %4 = vector.load %arg3[%c0_2, %c0_3, %c0_4] : memref<1x1x32xf32, #tpu.memory_space<vmem>>, vector<1x1x32xf32>
    %5 = vector.shape_cast %4 : vector<1x1x32xf32> to vector<1x32xf32>
    %c0_5 = arith.constant 0 : index
    %c0_6 = arith.constant 0 : index
    %c0_7 = arith.constant 0 : index
    %6 = vector.load %arg4[%c0_5, %c0_6, %c0_7] : memref<1x1x32xf32, #tpu.memory_space<vmem>>, vector<1x1x32xf32>
    %7 = vector.shape_cast %6 : vector<1x1x32xf32> to vector<1x32xf32>
    %cst = arith.constant dense<0.000000e+00> : vector<8xf32>
    %8 = vector.multi_reduction <add>, %3, %cst [1] : vector<8x32xf32> to vector<8xf32>
    %9 = vector.shape_cast %8 : vector<8xf32> to vector<8x1xf32>
    %cst_8 = arith.constant 3.200000e+01 : f32
    %10 = vector.broadcast %cst_8 : f32 to vector<8x1xf32>
    %11 = arith.divf %9, %10 : vector<8x1xf32>
    %12 = vector.broadcast %11 : vector<8x1xf32> to vector<8x32xf32>
    %13 = arith.subf %3, %12 : vector<8x32xf32>
    %14 = arith.mulf %13, %13 : vector<8x32xf32>
    %cst_9 = arith.constant dense<0.000000e+00> : vector<8xf32>
    %15 = vector.multi_reduction <add>, %14, %cst_9 [1] : vector<8x32xf32> to vector<8xf32>
    %16 = vector.shape_cast %15 : vector<8xf32> to vector<8x1xf32>
    %cst_10 = arith.constant 3.200000e+01 : f32
    %17 = vector.broadcast %cst_10 : f32 to vector<8x1xf32>
    %18 = arith.divf %16, %17 : vector<8x1xf32>
    %cst_11 = arith.constant 9.99999974E-6 : f32
    %19 = vector.broadcast %cst_11 : f32 to vector<8x1xf32>
    %20 = arith.addf %18, %19 : vector<8x1xf32>
    %21 = math.rsqrt %20 : vector<8x1xf32>
    %22 = vector.broadcast %21 : vector<8x1xf32> to vector<8x32xf32>
    %23 = arith.mulf %13, %22 : vector<8x32xf32>
    %24 = vector.broadcast %5 : vector<1x32xf32> to vector<8x32xf32>
    %25 = arith.mulf %23, %24 : vector<8x32xf32>
    %26 = vector.broadcast %7 : vector<1x32xf32> to vector<8x32xf32>
    %27 = arith.addf %25, %26 : vector<8x32xf32>
    %28 = arith.truncf %27 : vector<8x32xf32> to vector<8x32xbf16>
    %c0_12 = arith.constant 0 : index
    %c0_13 = arith.constant 0 : index
    %c0_14 = arith.constant 0 : index
    %29 = vector.load %arg5[%c0_12, %c0_13, %c0_14] : memref<1x32x32xbf16, #tpu.memory_space<vmem>>, vector<1x32x32xbf16>
    %30 = vector.shape_cast %29 : vector<1x32x32xbf16> to vector<32x32xbf16>
    %cst_15 = arith.constant dense<0.000000e+00> : vector<8x32xf32>
    %31 = tpu.matmul %28, %30, %cst_15 {dimension_numbers = #tpu.dot_dimension_numbers<[1], [0], [0], [1], [0, 0, 1, 1], [], []>} : vector<8x32xbf16>, vector<32x32xbf16>, vector<8x32xf32> -> vector<8x32xf32>
    %c0_16 = arith.constant 0 : index
    %c0_17 = arith.constant 0 : index
    %c0_18 = arith.constant 0 : index
    %32 = vector.load %arg6[%c0_16, %c0_17, %c0_18] : memref<1x32x32xbf16, #tpu.memory_space<vmem>>, vector<1x32x32xbf16>
    %33 = vector.shape_cast %32 : vector<1x32x32xbf16> to vector<32x32xbf16>
    %cst_19 = arith.constant dense<0.000000e+00> : vector<8x32xf32>
    %34 = tpu.matmul %28, %33, %cst_19 {dimension_numbers = #tpu.dot_dimension_numbers<[1], [0], [0], [1], [0, 0, 1, 1], [], []>} : vector<8x32xbf16>, vector<32x32xbf16>, vector<8x32xf32> -> vector<8x32xf32>
    %c0_20 = arith.constant 0 : index
    %c0_21 = arith.constant 0 : index
    %c0_22 = arith.constant 0 : index
    %35 = vector.load %arg7[%c0_20, %c0_21, %c0_22] : memref<1x32x32xbf16, #tpu.memory_space<vmem>>, vector<1x32x32xbf16>
    %36 = vector.shape_cast %35 : vector<1x32x32xbf16> to vector<32x32xbf16>
    %cst_23 = arith.constant dense<0.000000e+00> : vector<8x32xf32>
    %37 = tpu.matmul %28, %36, %cst_23 {dimension_numbers = #tpu.dot_dimension_numbers<[1], [0], [0], [1], [0, 0, 1, 1], [], []>} : vector<8x32xbf16>, vector<32x32xbf16>, vector<8x32xf32> -> vector<8x32xf32>
    %38 = vector.shape_cast %31 : vector<8x32xf32> to vector<1x8x4x8xf32>
    %39 = tpu.transpose %38, [0, 2, 1, 3] : vector<1x8x4x8xf32> -> vector<1x4x8x8xf32>
    %40 = vector.shape_cast %39 : vector<1x4x8x8xf32> to vector<4x8x8xf32>
    %41 = arith.truncf %40 : vector<4x8x8xf32> to vector<4x8x8xbf16>
    %42 = vector.shape_cast %34 : vector<8x32xf32> to vector<1x8x4x8xf32>
    %43 = tpu.transpose %42, [0, 2, 1, 3] : vector<1x8x4x8xf32> -> vector<1x4x8x8xf32>
    %44 = vector.shape_cast %43 : vector<1x4x8x8xf32> to vector<4x8x8xf32>
    %45 = arith.truncf %44 : vector<4x8x8xf32> to vector<4x8x8xbf16>
    %46 = vector.shape_cast %37 : vector<8x32xf32> to vector<1x8x4x8xf32>
    %47 = tpu.transpose %46, [0, 2, 1, 3] : vector<1x8x4x8xf32> -> vector<1x4x8x8xf32>
    %48 = vector.shape_cast %47 : vector<1x4x8x8xf32> to vector<4x8x8xf32>
    %49 = arith.truncf %48 : vector<4x8x8xf32> to vector<4x8x8xbf16>
    %cst_24 = arith.constant dense<0.000000e+00> : vector<4x8x8xf32>
    %50 = tpu.matmul %41, %45, %cst_24 {dimension_numbers = #tpu.dot_dimension_numbers<[2], [2], [1], [1], [0, 0, 0, 1, 1, 1], [0], [0]>} : vector<4x8x8xbf16>, vector<4x8x8xbf16>, vector<4x8x8xf32> -> vector<4x8x8xf32>
    %cst_25 = arith.constant dense<0xFF800000> : vector<4x8xf32>
    %51 = vector.multi_reduction <maximumf>, %50, %cst_25 [2] : vector<4x8x8xf32> to vector<4x8xf32>
    %52 = vector.shape_cast %51 : vector<4x8xf32> to vector<4x8x1xf32>
    %53 = vector.broadcast %52 : vector<4x8x1xf32> to vector<4x8x8xf32>
    %54 = arith.subf %50, %53 : vector<4x8x8xf32>
    %55 = math.exp %54 : vector<4x8x8xf32>
    %cst_26 = arith.constant dense<0.000000e+00> : vector<4x8xf32>
    %56 = vector.multi_reduction <add>, %55, %cst_26 [2] : vector<4x8x8xf32> to vector<4x8xf32>
    %57 = vector.shape_cast %56 : vector<4x8xf32> to vector<4x8x1xf32>
    %58 = tpu.reciprocal %57 : vector<4x8x1xf32> -> vector<4x8x1xf32>
    %59 = vector.broadcast %58 : vector<4x8x1xf32> to vector<4x8x8xf32>
    %60 = arith.mulf %55, %59 : vector<4x8x8xf32>
    %61 = arith.truncf %60 : vector<4x8x8xf32> to vector<4x8x8xbf16>
    %cst_27 = arith.constant dense<0.000000e+00> : vector<4x8x8xf32>
    %62 = tpu.matmul %61, %49, %cst_27 {dimension_numbers = #tpu.dot_dimension_numbers<[2], [1], [1], [2], [0, 0, 0, 1, 1, 2], [0], [0]>} : vector<4x8x8xbf16>, vector<4x8x8xbf16>, vector<4x8x8xf32> -> vector<4x8x8xf32>
    %63 = vector.shape_cast %62 : vector<4x8x8xf32> to vector<1x4x8x8xf32>
    %64 = tpu.transpose %63, [0, 2, 1, 3] : vector<1x4x8x8xf32> -> vector<1x8x4x8xf32>
    %65 = vector.shape_cast %64 : vector<1x8x4x8xf32> to vector<8x32xf32>
    %66 = arith.truncf %65 : vector<8x32xf32> to vector<8x32xbf16>
    %c0_28 = arith.constant 0 : index
    %c0_29 = arith.constant 0 : index
    %c0_30 = arith.constant 0 : index
    %67 = vector.load %arg8[%c0_28, %c0_29, %c0_30] : memref<1x32x32xbf16, #tpu.memory_space<vmem>>, vector<1x32x32xbf16>
    %68 = vector.shape_cast %67 : vector<1x32x32xbf16> to vector<32x32xbf16>
    %cst_31 = arith.constant dense<0.000000e+00> : vector<8x32xf32>
    %69 = tpu.matmul %66, %68, %cst_31 {dimension_numbers = #tpu.dot_dimension_numbers<[1], [0], [0], [1], [0, 0, 1, 1], [], []>} : vector<8x32xbf16>, vector<32x32xbf16>, vector<8x32xf32> -> vector<8x32xf32>
    %c0_32 = arith.constant 0 : index
    %c0_33 = arith.constant 0 : index
    %c0_34 = arith.constant 0 : index
    %70 = vector.load %arg9[%c0_32, %c0_33, %c0_34] : memref<1x1x32xf32, #tpu.memory_space<vmem>>, vector<1x1x32xf32>
    %71 = vector.shape_cast %70 : vector<1x1x32xf32> to vector<1x32xf32>
    %72 = vector.broadcast %71 : vector<1x32xf32> to vector<8x32xf32>
    %73 = arith.addf %69, %72 : vector<8x32xf32>
    %74 = arith.addf %3, %73 : vector<8x32xf32>
    %c0_35 = arith.constant 0 : index
    %c0_36 = arith.constant 0 : index
    %c0_37 = arith.constant 0 : index
    %75 = vector.load %arg10[%c0_35, %c0_36, %c0_37] : memref<1x1x32xf32, #tpu.memory_space<vmem>>, vector<1x1x32xf32>
    %76 = vector.shape_cast %75 : vector<1x1x32xf32> to vector<1x32xf32>
    %c0_38 = arith.constant 0 : index
    %c0_39 = arith.constant 0 : index
    %c0_40 = arith.constant 0 : index
    %77 = vector.load %arg11[%c0_38, %c0_39, %c0_40] : memref<1x1x32xf32, #tpu.memory_space<vmem>>, vector<1x1x32xf32>
    %78 = vector.shape_cast %77 : vector<1x1x32xf32> to vector<1x32xf32>
    %cst_41 = arith.constant dense<0.000000e+00> : vector<8xf32>
    %79 = vector.multi_reduction <add>, %74, %cst_41 [1] : vector<8x32xf32> to vector<8xf32>
    %80 = vector.shape_cast %79 : vector<8xf32> to vector<8x1xf32>
    %cst_42 = arith.constant 3.200000e+01 : f32
    %81 = vector.broadcast %cst_42 : f32 to vector<8x1xf32>
    %82 = arith.divf %80, %81 : vector<8x1xf32>
    %83 = vector.broadcast %82 : vector<8x1xf32> to vector<8x32xf32>
    %84 = arith.subf %74, %83 : vector<8x32xf32>
    %85 = arith.mulf %84, %84 : vector<8x32xf32>
    %cst_43 = arith.constant dense<0.000000e+00> : vector<8xf32>
    %86 = vector.multi_reduction <add>, %85, %cst_43 [1] : vector<8x32xf32> to vector<8xf32>
    %87 = vector.shape_cast %86 : vector<8xf32> to vector<8x1xf32>
    %cst_44 = arith.constant 3.200000e+01 : f32
    %88 = vector.broadcast %cst_44 : f32 to vector<8x1xf32>
    %89 = arith.divf %87, %88 : vector<8x1xf32>
    %cst_45 = arith.constant 9.99999974E-6 : f32
    %90 = vector.broadcast %cst_45 : f32 to vector<8x1xf32>
    %91 = arith.addf %89, %90 : vector<8x1xf32>
    %92 = math.rsqrt %91 : vector<8x1xf32>
    %93 = vector.broadcast %92 : vector<8x1xf32> to vector<8x32xf32>
    %94 = arith.mulf %84, %93 : vector<8x32xf32>
    %95 = vector.broadcast %76 : vector<1x32xf32> to vector<8x32xf32>
    %96 = arith.mulf %94, %95 : vector<8x32xf32>
    %97 = vector.broadcast %78 : vector<1x32xf32> to vector<8x32xf32>
    %98 = arith.addf %96, %97 : vector<8x32xf32>
    %99 = arith.truncf %98 : vector<8x32xf32> to vector<8x32xbf16>
    %c0_46 = arith.constant 0 : index
    %c0_47 = arith.constant 0 : index
    %c0_48 = arith.constant 0 : index
    %100 = vector.load %arg12[%c0_46, %c0_47, %c0_48] : memref<1x32x64xbf16, #tpu.memory_space<vmem>>, vector<1x32x64xbf16>
    %101 = vector.shape_cast %100 : vector<1x32x64xbf16> to vector<32x64xbf16>
    %cst_49 = arith.constant dense<0.000000e+00> : vector<8x64xf32>
    %102 = tpu.matmul %99, %101, %cst_49 {dimension_numbers = #tpu.dot_dimension_numbers<[1], [0], [0], [1], [0, 0, 1, 1], [], []>} : vector<8x32xbf16>, vector<32x64xbf16>, vector<8x64xf32> -> vector<8x64xf32>
    %c0_50 = arith.constant 0 : index
    %c0_51 = arith.constant 0 : index
    %c0_52 = arith.constant 0 : index
    %103 = vector.load %arg13[%c0_50, %c0_51, %c0_52] : memref<1x1x64xf32, #tpu.memory_space<vmem>>, vector<1x1x64xf32>
    %104 = vector.shape_cast %103 : vector<1x1x64xf32> to vector<1x64xf32>
    %105 = vector.broadcast %104 : vector<1x64xf32> to vector<8x64xf32>
    %106 = arith.addf %102, %105 : vector<8x64xf32>
    %107 = arith.negf %106 : vector<8x64xf32>
    %108 = math.exp %107 : vector<8x64xf32>
    %cst_53 = arith.constant 1.000000e+00 : f32
    %109 = vector.broadcast %cst_53 : f32 to vector<8x64xf32>
    %110 = arith.addf %109, %108 : vector<8x64xf32>
    %111 = arith.divf %109, %110 : vector<8x64xf32>
    %112 = arith.mulf %106, %111 : vector<8x64xf32>
    %113 = arith.truncf %112 : vector<8x64xf32> to vector<8x64xbf16>
    %c0_54 = arith.constant 0 : index
    %c0_55 = arith.constant 0 : index
    %c0_56 = arith.constant 0 : index
    %114 = vector.load %arg14[%c0_54, %c0_55, %c0_56] : memref<1x64x32xbf16, #tpu.memory_space<vmem>>, vector<1x64x32xbf16>
    %115 = vector.shape_cast %114 : vector<1x64x32xbf16> to vector<64x32xbf16>
    %cst_57 = arith.constant dense<0.000000e+00> : vector<8x32xf32>
    %116 = tpu.matmul %113, %115, %cst_57 {dimension_numbers = #tpu.dot_dimension_numbers<[1], [0], [0], [1], [0, 0, 1, 1], [], []>} : vector<8x64xbf16>, vector<64x32xbf16>, vector<8x32xf32> -> vector<8x32xf32>
    %c0_58 = arith.constant 0 : index
    %c0_59 = arith.constant 0 : index
    %c0_60 = arith.constant 0 : index
    %117 = vector.load %arg15[%c0_58, %c0_59, %c0_60] : memref<1x1x32xf32, #tpu.memory_space<vmem>>, vector<1x1x32xf32>
    %118 = vector.shape_cast %117 : vector<1x1x32xf32> to vector<1x32xf32>
    %119 = vector.broadcast %118 : vector<1x32xf32> to vector<8x32xf32>
    %120 = arith.addf %116, %119 : vector<8x32xf32>
    %121 = arith.addf %74, %120 : vector<8x32xf32>
    %c0_61 = arith.constant 0 : index
    %c0_62 = arith.constant 0 : index
    %122 = vector.load %arg17[%c0_61, %c0_62] : memref<8x32xf32, #tpu.memory_space<vmem>>, vector<8x32xf32>
    tpu.vector_store %arg17[%c0_61, %c0_62], %121 {strides = array<i32>} : memref<8x32xf32, #tpu.memory_space<vmem>>, vector<8x32xf32>,
    %c1_i32 = arith.constant 1 : i32
    %123 = arith.cmpi eq, %arg1, %c1_i32 : i32
    %124 = arith.extui %123 : i1 to i32
    %c0_i32_63 = arith.constant 0 : i32
    %125 = arith.cmpi ne, %124, %c0_i32_63 : i32
    scf.if %125 {
      %c0_64 = arith.constant 0 : index
      %c0_65 = arith.constant 0 : index
      %126 = vector.load %arg16[%c0_64, %c0_65] : memref<8x32xf32, #tpu.memory_space<vmem>>, vector<8x32xf32>
      tpu.vector_store %arg16[%c0_64, %c0_65], %121 {strides = array<i32>} : memref<8x32xf32, #tpu.memory_space<vmem>>, vector<8x32xf32>,
    } else {
    }
    return
  }
  func.func @transform_0(%arg0: i32, %arg1: i32) -> (i32, i32) {
    %c0_i32 = arith.constant 0 : i32
    %c0_i32_0 = arith.constant 0 : i32
    return %arg0, %c0_i32 : i32, i32
  }
  func.func @transform_1(%arg0: i32, %arg1: i32) -> (i32, i32, i32) {
    %c0_i32 = arith.constant 0 : i32
    %c0_i32_0 = arith.constant 0 : i32
    %c0_i32_1 = arith.constant 0 : i32
    return %arg1, %c0_i32, %c0_i32_0 : i32, i32, i32
  }
  func.func @transform_2(%arg0: i32, %arg1: i32) -> (i32, i32, i32) {
    %c0_i32 = arith.constant 0 : i32
    %c0_i32_0 = arith.constant 0 : i32
    %c0_i32_1 = arith.constant 0 : i32
    return %arg1, %c0_i32, %c0_i32_0 : i32, i32, i32
  }
  func.func @transform_3(%arg0: i32, %arg1: i32) -> (i32, i32, i32) {
    %c0_i32 = arith.constant 0 : i32
    %c0_i32_0 = arith.constant 0 : i32
    %c0_i32_1 = arith.constant 0 : i32
    return %arg1, %c0_i32, %c0_i32_0 : i32, i32, i32
  }
  func.func @transform_4(%arg0: i32, %arg1: i32) -> (i32, i32, i32) {
    %c0_i32 = arith.constant 0 : i32
    %c0_i32_0 = arith.constant 0 : i32
    %c0_i32_1 = arith.constant 0 : i32
    return %arg1, %c0_i32, %c0_i32_0 : i32, i32, i32
  }
  func.func @transform_5(%arg0: i32, %arg1: i32) -> (i32, i32, i32) {
    %c0_i32 = arith.constant 0 : i32
    %c0_i32_0 = arith.constant 0 : i32
    %c0_i32_1 = arith.constant 0 : i32
    return %arg1, %c0_i32, %c0_i32_0 : i32, i32, i32
  }
  func.func @transform_6(%arg0: i32, %arg1: i32) -> (i32, i32, i32) {
    %c0_i32 = arith.constant 0 : i32
    %c0_i32_0 = arith.constant 0 : i32
    %c0_i32_1 = arith.constant 0 : i32
    return %arg1, %c0_i32, %c0_i32_0 : i32, i32, i32
  }
  func.func @transform_7(%arg0: i32, %arg1: i32) -> (i32, i32, i32) {
    %c0_i32 = arith.constant 0 : i32
    %c0_i32_0 = arith.constant 0 : i32
    %c0_i32_1 = arith.constant 0 : i32
    return %arg1, %c0_i32, %c0_i32_0 : i32, i32, i32
  }
  func.func @transform_8(%arg0: i32, %arg1: i32) -> (i32, i32, i32) {
    %c0_i32 = arith.constant 0 : i32
    %c0_i32_0 = arith.constant 0 : i32
    %c0_i32_1 = arith.constant 0 : i32
    return %arg1, %c0_i32, %c0_i32_0 : i32, i32, i32
  }
  func.func @transform_9(%arg0: i32, %arg1: i32) -> (i32, i32, i32) {
    %c0_i32 = arith.constant 0 : i32
    %c0_i32_0 = arith.constant 0 : i32
    %c0_i32_1 = arith.constant 0 : i32
    return %arg1, %c0_i32, %c0_i32_0 : i32, i32, i32
  }
  func.func @transform_10(%arg0: i32, %arg1: i32) -> (i32, i32, i32) {
    %c0_i32 = arith.constant 0 : i32
    %c0_i32_0 = arith.constant 0 : i32
    %c0_i32_1 = arith.constant 0 : i32
    return %arg1, %c0_i32, %c0_i32_0 : i32, i32, i32
  }
  func.func @transform_11(%arg0: i32, %arg1: i32) -> (i32, i32, i32) {
    %c0_i32 = arith.constant 0 : i32
    %c0_i32_0 = arith.constant 0 : i32
    %c0_i32_1 = arith.constant 0 : i32
    return %arg1, %c0_i32, %c0_i32_0 : i32, i32, i32
  }
  func.func @transform_12(%arg0: i32, %arg1: i32) -> (i32, i32, i32) {
    %c0_i32 = arith.constant 0 : i32
    %c0_i32_0 = arith.constant 0 : i32
    %c0_i32_1 = arith.constant 0 : i32
    return %arg1, %c0_i32, %c0_i32_0 : i32, i32, i32
  }
  func.func @transform_13(%arg0: i32, %arg1: i32) -> (i32, i32, i32) {
    %c0_i32 = arith.constant 0 : i32
    %c0_i32_0 = arith.constant 0 : i32
    %c0_i32_1 = arith.constant 0 : i32
    return %arg1, %c0_i32, %c0_i32_0 : i32, i32, i32
  }
  func.func @transform_14(%arg0: i32, %arg1: i32) -> (i32, i32) {
    %c0_i32 = arith.constant 0 : i32
    %c0_i32_0 = arith.constant 0 : i32
    return %arg0, %c0_i32 : i32, i32
  }
}

</mosaic_0001>

<llo_original>
// kernel: tpu_custom_call.1
$region0: #{tpu_custom_call.1}
  #allocation0 [shape = 'u32[]', space=smem, size = 0x4, offset = 0x4, fixed_abs, tag = 'smem constant byte address 0x4 - core index']
  #allocation1 [shape = 'u32[144,128]{1,0:T(1,128)}', space=vmem, size = 0x12000, scoped, tag = 'internal scratch']
  #allocation2 [shape = 'f32[8,32]{1,0:T(8,128)}', space=vmem, size = 0x1000, scoped, tag = 'scratch operand']
  %s0 = inlined_call_operand.vmem [shape: f32[32,32], index: 0, kind: input, shape index: {}]
  %s1 = inlined_call_operand.hbm [shape: f32[2,1,32], index: 1, kind: input, shape index: {}]
  %s2 = inlined_call_operand.vmem [shape: f32[2,1,32], index: 2, kind: input, shape index: {}]
  %s3 = inlined_call_operand.vmem [shape: bf16[2,32,32], index: 3, kind: input, shape index: {}]
  %s4 = inlined_call_operand.vmem [shape: bf16[2,32,32], index: 4, kind: input, shape index: {}]
  %s5 = inlined_call_operand.hbm [shape: bf16[2,32,32], index: 5, kind: input, shape index: {}]
  %s6 = inlined_call_operand.hbm [shape: bf16[2,32,32], index: 6, kind: input, shape index: {}]
  %s7 = inlined_call_operand.vmem [shape: f32[2,1,32], index: 7, kind: input, shape index: {}]
  %s8 = inlined_call_operand.vmem [shape: f32[2,1,32], index: 8, kind: input, shape index: {}]
  %s9 = inlined_call_operand.vmem [shape: f32[2,1,32], index: 9, kind: input, shape index: {}]
  %s10 = inlined_call_operand.hbm [shape: bf16[2,32,64], index: 10, kind: input, shape index: {}]
  %s11 = inlined_call_operand.vmem [shape: f32[2,1,64], index: 11, kind: input, shape index: {}]
  %s12 = inlined_call_operand.vmem [shape: bf16[2,64,32], index: 12, kind: input, shape index: {}]
  %s13 = inlined_call_operand.vmem [shape: f32[2,1,32], index: 13, kind: input, shape index: {}]
  %s14 = inlined_call_operand.hbm [shape: f32[32,32], index: 14, kind: output, shape index: {}]
  %s15 = sld [smem:[#allocation0]]
  $region113: #{tpu_custom_call.1} parent=0
    _
  %s17 = ssub.s32 1, %s15
  %s18 = scalar_select 0, %s17, %s15
  $region1: #{tpu_custom_call.1} parent=0
    #allocation3 [shape = 'u8[1024]{0}', space=vmem, size = 0x400, scoped, tag = 'input window, operand 1']
    #allocation4 [shape = 's32[2]{0}', space=sflag, size = 0x8, scoped, tag = 'scoped memory for tpu_custom_call.1']
    #allocation5 [shape = 's32[2]{0}', space=sflag, size = 0x8, scoped, tag = 'scoped memory for tpu_custom_call.1']
    #allocation6 [shape = 'u8[16384]{0}', space=vmem, size = 0x4000, scoped, tag = 'input window, operand 5']
    #allocation7 [shape = 's32[2]{0}', space=sflag, size = 0x8, scoped, tag = 'scoped memory for tpu_custom_call.1']
    #allocation8 [shape = 'u8[16384]{0}', space=vmem, size = 0x4000, scoped, tag = 'input window, operand 6']
    #allocation9 [shape = 'u8[16384]{0}', space=vmem, size = 0x4000, scoped, tag = 'input window, operand 10']
    #allocation10 [shape = 's32[2]{0}', space=sflag, size = 0x8, scoped, tag = 'scoped memory for tpu_custom_call.1']
    #allocation11 [shape = 'u8[8192]{0}', space=vmem, size = 0x2000, scoped, tag = 'output window, operand 0']
    %19 = vsyncpa [#allocation4], 0
    %s20 = scalar_lea.sflag [#allocation4], 1
    %21 = vsyncpa %s20, 0
    %22 = vsyncpa [#allocation7], 0
    %s23 = scalar_lea.sflag [#allocation7], 1
    %24 = vsyncpa %s23, 0
    %25 = vsyncpa [#allocation10], 0
    %s26 = scalar_lea.sflag [#allocation10], 1
    %27 = vsyncpa %s26, 0
    %28 = vsyncpa [#allocation5], 0
    %s29 = scalar_lea.sflag [#allocation5], 1
    %30 = vsyncpa %s29, 0
    loop: start=0, step=1, limit=10
    $region2: #{tpu_custom_call.1} parent=1 // loop_pre_header
      _
    $region3: #{tpu_custom_call.1} parent=1 // loop_header
      %s32 = sphi 0, %s36
      %p33 = scmp.ge.s32.totalorder %s32, 10
      %s39 = sphi 0, %s51
      %s40 = sphi 0, %s47
      %s41 = sphi 0, %s39
      %s42 = sphi 0, %s40
      %s43 = sphi 0, %s41
      %s44 = sphi 0, %s42
      %s54 = sphi 0, %s56
      %s57 = sphi 0, %s54
      %s58 = sphi 0, %s57
      %s74 = sphi 0, %s58
      %s80 = sphi 0, %s82
      %s83 = sphi 0, %s80
      %s84 = sphi 0, %s83
      %s100 = sphi 0, %s84
      %s106 = sphi 0, %s108
      %s109 = sphi 0, %s106
      %s110 = sphi 0, %s109
      %s126 = sphi 0, %s110
      %s132 = sphi 0, %s134
      %s135 = sphi 0, %s132
      %s136 = sphi 0, %s135
      %s152 = sphi 0, %s136
      %s158 = sphi 0, %s160
      %s161 = sphi 0, %s158
      %s162 = sphi 0, %s161
      %s178 = sphi 0, %s162
      %s184 = sphi 0, %s186
      %s187 = sphi 0, %s184
      %s188 = sphi 0, %s187
      %s204 = sphi 0, %s188
      %s210 = sphi 0, %s212
      %s213 = sphi 0, %s210
      %s214 = sphi 0, %s213
      %s230 = sphi 0, %s214
      %s236 = sphi 0, %s238
      %s239 = sphi 0, %s236
      %s240 = sphi 0, %s239
      %s256 = sphi 0, %s240
      %s262 = sphi 0, %s264
      %s265 = sphi 0, %s262
      %s266 = sphi 0, %s265
      %s282 = sphi 0, %s266
      %s288 = sphi 0, %s290
      %s291 = sphi 0, %s288
      %s292 = sphi 0, %s291
      %s308 = sphi 0, %s292
      %s314 = sphi 0, %s316
      %s317 = sphi 0, %s314
      %s318 = sphi 0, %s317
      %s334 = sphi 0, %s318
      %s340 = sphi 0, %s342
      %s343 = sphi 0, %s340
      %s344 = sphi 0, %s343
      %s360 = sphi 0, %s344
      %s366 = sphi 0, %s368
      %s369 = sphi 0, %s366
      %s370 = sphi 0, %s369
      %s386 = sphi 0, %s370
      %s392 = sphi 0, %s394
      %s395 = sphi 0, %s392
      %s396 = sphi 0, %s395
      %s412 = sphi 0, %s396
      %s418 = sphi 0, %s420
      %s421 = sphi 0, %s418
      %s422 = sphi 0, %s421
      %s438 = sphi 0, %s422
    $region4: #{tpu_custom_call.1} parent=1 // loop_header_branch
      %35 = sbr.rel (%p33) target = $region8
    $region5: #{tpu_custom_call.1} parent=1 // loop_body
      %s37 = ssub.s32 %s32, 1
      %s38 = ssub.s32 %s32, 2
      %s45 = sadd.s32 1, %s40
      %p46 = scmp.ge.s32.totalorder %s45, 2
      %s47 = scalar_select %p46, 0, %s45
      %s48 = sadd.s32 1, %s39
      %s49 = scalar_select %p46, %s48, %s39
      %p50 = scmp.ge.s32.totalorder %s49, 4
      %s51 = scalar_select %p50, 0, %s49
      %s52 = ssub.s32 %s39, %s51
      %p53 = scmp.eq.s32.totalorder %s52, 0
      %s55 = sadd.s32 %s54, 1
      %s56 = scalar_select %p53, %s54, %s55
      %p59 = pneg %p53
      %p60 = scmp.eq.s32.totalorder %s32, 7
      %p61 = por %p59, %p60
      %p62 = scmp.ne.s32.totalorder %s54, %s57
      %p63 = scmp.eq.s32.totalorder %s32, 0
      %p64 = por %p62, %p63
      %p65 = scmp.ne.s32.totalorder %s54, %s57
      %p66 = scmp.eq.s32.totalorder %s37, 7
      %p67 = por %p65, %p66
      %p68 = scmp.ne.s32.totalorder %s57, %s58
      %p69 = scmp.eq.s32.totalorder %s37, 0
      %p70 = por %p68, %p69
      %p71 = scmp.ne.s32.totalorder %s57, %s58
      %p72 = scmp.eq.s32.totalorder %s38, 7
      %p73 = por %p71, %p72
      %p75 = scmp.ne.s32.totalorder %s58, %s74
      %p76 = scmp.eq.s32.totalorder %s38, 0
      %p77 = por %p75, %p76
      %s78 = ssub.s32 %s40, %s47
      %p79 = scmp.eq.s32.totalorder %s78, 0
      %s81 = sadd.s32 %s80, 1
      %s82 = scalar_select %p79, %s80, %s81
      %p85 = pneg %p79
      %p86 = scmp.eq.s32.totalorder %s32, 7
      %p87 = por %p85, %p86
      %p88 = scmp.ne.s32.totalorder %s80, %s83
      %p89 = scmp.eq.s32.totalorder %s32, 0
      %p90 = por %p88, %p89
      %p91 = scmp.ne.s32.totalorder %s80, %s83
      %p92 = scmp.eq.s32.totalorder %s37, 7
      %p93 = por %p91, %p92
      %p94 = scmp.ne.s32.totalorder %s83, %s84
      %p95 = scmp.eq.s32.totalorder %s37, 0
      %p96 = por %p94, %p95
      %p97 = scmp.ne.s32.totalorder %s83, %s84
      %p98 = scmp.eq.s32.totalorder %s38, 7
      %p99 = por %p97, %p98
      %p101 = scmp.ne.s32.totalorder %s84, %s100
      %p102 = scmp.eq.s32.totalorder %s38, 0
      %p103 = por %p101, %p102
      %s104 = ssub.s32 %s40, %s47
      %p105 = scmp.eq.s32.totalorder %s104, 0
      %s107 = sadd.s32 %s106, 1
      %s108 = scalar_select %p105, %s106, %s107
      %p111 = pneg %p105
      %p112 = scmp.eq.s32.totalorder %s32, 7
      %p113 = por %p111, %p112
      %p114 = scmp.ne.s32.totalorder %s106, %s109
      %p115 = scmp.eq.s32.totalorder %s32, 0
      %p116 = por %p114, %p115
      %p117 = scmp.ne.s32.totalorder %s106, %s109
      %p118 = scmp.eq.s32.totalorder %s37, 7
      %p119 = por %p117, %p118
      %p120 = scmp.ne.s32.totalorder %s109, %s110
      %p121 = scmp.eq.s32.totalorder %s37, 0
      %p122 = por %p120, %p121
      %p123 = scmp.ne.s32.totalorder %s109, %s110
      %p124 = scmp.eq.s32.totalorder %s38, 7
      %p125 = por %p123, %p124
      %p127 = scmp.ne.s32.totalorder %s110, %s126
      %p128 = scmp.eq.s32.totalorder %s38, 0
      %p129 = por %p127, %p128
      %s130 = ssub.s32 %s40, %s47
      %p131 = scmp.eq.s32.totalorder %s130, 0
      %s133 = sadd.s32 %s132, 1
      %s134 = scalar_select %p131, %s132, %s133
      %p137 = pneg %p131
      %p138 = scmp.eq.s32.totalorder %s32, 7
      %p139 = por %p137, %p138
      %p140 = scmp.ne.s32.totalorder %s132, %s135
      %p141 = scmp.eq.s32.totalorder %s32, 0
      %p142 = por %p140, %p141
      %p143 = scmp.ne.s32.totalorder %s132, %s135
      %p144 = scmp.eq.s32.totalorder %s37, 7
      %p145 = por %p143, %p144
      %p146 = scmp.ne.s32.totalorder %s135, %s136
      %p147 = scmp.eq.s32.totalorder %s37, 0
      %p148 = por %p146, %p147
      %p149 = scmp.ne.s32.totalorder %s135, %s136
      %p150 = scmp.eq.s32.totalorder %s38, 7
      %p151 = por %p149, %p150
      %p153 = scmp.ne.s32.totalorder %s136, %s152
      %p154 = scmp.eq.s32.totalorder %s38, 0
      %p155 = por %p153, %p154
      %s156 = ssub.s32 %s40, %s47
      %p157 = scmp.eq.s32.totalorder %s156, 0
      %s159 = sadd.s32 %s158, 1
      %s160 = scalar_select %p157, %s158, %s159
      %p163 = pneg %p157
      %p164 = scmp.eq.s32.totalorder %s32, 7
      %p165 = por %p163, %p164
      %p166 = scmp.ne.s32.totalorder %s158, %s161
      %p167 = scmp.eq.s32.totalorder %s32, 0
      %p168 = por %p166, %p167
      %p169 = scmp.ne.s32.totalorder %s158, %s161
      %p170 = scmp.eq.s32.totalorder %s37, 7
      %p171 = por %p169, %p170
      %p172 = scmp.ne.s32.totalorder %s161, %s162
      %p173 = scmp.eq.s32.totalorder %s37, 0
      %p174 = por %p172, %p173
      %p175 = scmp.ne.s32.totalorder %s161, %s162
      %p176 = scmp.eq.s32.totalorder %s38, 7
      %p177 = por %p175, %p176
      %p179 = scmp.ne.s32.totalorder %s162, %s178
      %p180 = scmp.eq.s32.totalorder %s38, 0
      %p181 = por %p179, %p180
      %s182 = ssub.s32 %s40, %s47
      %p183 = scmp.eq.s32.totalorder %s182, 0
      %s185 = sadd.s32 %s184, 1
      %s186 = scalar_select %p183, %s184, %s185
      %p189 = pneg %p183
      %p190 = scmp.eq.s32.totalorder %s32, 7
      %p191 = por %p189, %p190
      %p192 = scmp.ne.s32.totalorder %s184, %s187
      %p193 = scmp.eq.s32.totalorder %s32, 0
      %p194 = por %p192, %p193
      %p195 = scmp.ne.s32.totalorder %s184, %s187
      %p196 = scmp.eq.s32.totalorder %s37, 7
      %p197 = por %p195, %p196
      %p198 = scmp.ne.s32.totalorder %s187, %s188
      %p199 = scmp.eq.s32.totalorder %s37, 0
      %p200 = por %p198, %p199
      %p201 = scmp.ne.s32.totalorder %s187, %s188
      %p202 = scmp.eq.s32.totalorder %s38, 7
      %p203 = por %p201, %p202
      %p205 = scmp.ne.s32.totalorder %s188, %s204
      %p206 = scmp.eq.s32.totalorder %s38, 0
      %p207 = por %p205, %p206
      %s208 = ssub.s32 %s40, %s47
      %p209 = scmp.eq.s32.totalorder %s208, 0
      %s211 = sadd.s32 %s210, 1
      %s212 = scalar_select %p209, %s210, %s211
      %p215 = pneg %p209
      %p216 = scmp.eq.s32.totalorder %s32, 7
      %p217 = por %p215, %p216
      %p218 = scmp.ne.s32.totalorder %s210, %s213
      %p219 = scmp.eq.s32.totalorder %s32, 0
      %p220 = por %p218, %p219
      %p221 = scmp.ne.s32.totalorder %s210, %s213
      %p222 = scmp.eq.s32.totalorder %s37, 7
      %p223 = por %p221, %p222
      %p224 = scmp.ne.s32.totalorder %s213, %s214
      %p225 = scmp.eq.s32.totalorder %s37, 0
      %p226 = por %p224, %p225
      %p227 = scmp.ne.s32.totalorder %s213, %s214
      %p228 = scmp.eq.s32.totalorder %s38, 7
      %p229 = por %p227, %p228
      %p231 = scmp.ne.s32.totalorder %s214, %s230
      %p232 = scmp.eq.s32.totalorder %s38, 0
      %p233 = por %p231, %p232
      %s234 = ssub.s32 %s40, %s47
      %p235 = scmp.eq.s32.totalorder %s234, 0
      %s237 = sadd.s32 %s236, 1
      %s238 = scalar_select %p235, %s236, %s237
      %p241 = pneg %p235
      %p242 = scmp.eq.s32.totalorder %s32, 7
      %p243 = por %p241, %p242
      %p244 = scmp.ne.s32.totalorder %s236, %s239
      %p245 = scmp.eq.s32.totalorder %s32, 0
      %p246 = por %p244, %p245
      %p247 = scmp.ne.s32.totalorder %s236, %s239
      %p248 = scmp.eq.s32.totalorder %s37, 7
      %p249 = por %p247, %p248
      %p250 = scmp.ne.s32.totalorder %s239, %s240
      %p251 = scmp.eq.s32.totalorder %s37, 0
      %p252 = por %p250, %p251
      %p253 = scmp.ne.s32.totalorder %s239, %s240
      %p254 = scmp.eq.s32.totalorder %s38, 7
      %p255 = por %p253, %p254
      %p257 = scmp.ne.s32.totalorder %s240, %s256
      %p258 = scmp.eq.s32.totalorder %s38, 0
      %p259 = por %p257, %p258
      %s260 = ssub.s32 %s40, %s47
      %p261 = scmp.eq.s32.totalorder %s260, 0
      %s263 = sadd.s32 %s262, 1
      %s264 = scalar_select %p261, %s262, %s263
      %p267 = pneg %p261
      %p268 = scmp.eq.s32.totalorder %s32, 7
      %p269 = por %p267, %p268
      %p270 = scmp.ne.s32.totalorder %s262, %s265
      %p271 = scmp.eq.s32.totalorder %s32, 0
      %p272 = por %p270, %p271
      %p273 = scmp.ne.s32.totalorder %s262, %s265
      %p274 = scmp.eq.s32.totalorder %s37, 7
      %p275 = por %p273, %p274
      %p276 = scmp.ne.s32.totalorder %s265, %s266
      %p277 = scmp.eq.s32.totalorder %s37, 0
      %p278 = por %p276, %p277
      %p279 = scmp.ne.s32.totalorder %s265, %s266
      %p280 = scmp.eq.s32.totalorder %s38, 7
      %p281 = por %p279, %p280
      %p283 = scmp.ne.s32.totalorder %s266, %s282
      %p284 = scmp.eq.s32.totalorder %s38, 0
      %p285 = por %p283, %p284
      %s286 = ssub.s32 %s40, %s47
      %p287 = scmp.eq.s32.totalorder %s286, 0
      %s289 = sadd.s32 %s288, 1
      %s290 = scalar_select %p287, %s288, %s289
      %p293 = pneg %p287
      %p294 = scmp.eq.s32.totalorder %s32, 7
      %p295 = por %p293, %p294
      %p296 = scmp.ne.s32.totalorder %s288, %s291
      %p297 = scmp.eq.s32.totalorder %s32, 0
      %p298 = por %p296, %p297
      %p299 = scmp.ne.s32.totalorder %s288, %s291
      %p300 = scmp.eq.s32.totalorder %s37, 7
      %p301 = por %p299, %p300
      %p302 = scmp.ne.s32.totalorder %s291, %s292
      %p303 = scmp.eq.s32.totalorder %s37, 0
      %p304 = por %p302, %p303
      %p305 = scmp.ne.s32.totalorder %s291, %s292
      %p306 = scmp.eq.s32.totalorder %s38, 7
      %p307 = por %p305, %p306
      %p309 = scmp.ne.s32.totalorder %s292, %s308
      %p310 = scmp.eq.s32.totalorder %s38, 0
      %p311 = por %p309, %p310
      %s312 = ssub.s32 %s40, %s47
      %p313 = scmp.eq.s32.totalorder %s312, 0
      %s315 = sadd.s32 %s314, 1
      %s316 = scalar_select %p313, %s314, %s315
      %p319 = pneg %p313
      %p320 = scmp.eq.s32.totalorder %s32, 7
      %p321 = por %p319, %p320
      %p322 = scmp.ne.s32.totalorder %s314, %s317
      %p323 = scmp.eq.s32.totalorder %s32, 0
      %p324 = por %p322, %p323
      %p325 = scmp.ne.s32.totalorder %s314, %s317
      %p326 = scmp.eq.s32.totalorder %s37, 7
      %p327 = por %p325, %p326
      %p328 = scmp.ne.s32.totalorder %s317, %s318
      %p329 = scmp.eq.s32.totalorder %s37, 0
      %p330 = por %p328, %p329
      %p331 = scmp.ne.s32.totalorder %s317, %s318
      %p332 = scmp.eq.s32.totalorder %s38, 7
      %p333 = por %p331, %p332
      %p335 = scmp.ne.s32.totalorder %s318, %s334
      %p336 = scmp.eq.s32.totalorder %s38, 0
      %p337 = por %p335, %p336
      %s338 = ssub.s32 %s40, %s47
      %p339 = scmp.eq.s32.totalorder %s338, 0
      %s341 = sadd.s32 %s340, 1
      %s342 = scalar_select %p339, %s340, %s341
      %p345 = pneg %p339
      %p346 = scmp.eq.s32.totalorder %s32, 7
      %p347 = por %p345, %p346
      %p348 = scmp.ne.s32.totalorder %s340, %s343
      %p349 = scmp.eq.s32.totalorder %s32, 0
      %p350 = por %p348, %p349
      %p351 = scmp.ne.s32.totalorder %s340, %s343
      %p352 = scmp.eq.s32.totalorder %s37, 7
      %p353 = por %p351, %p352
      %p354 = scmp.ne.s32.totalorder %s343, %s344
      %p355 = scmp.eq.s32.totalorder %s37, 0
      %p356 = por %p354, %p355
      %p357 = scmp.ne.s32.totalorder %s343, %s344
      %p358 = scmp.eq.s32.totalorder %s38, 7
      %p359 = por %p357, %p358
      %p361 = scmp.ne.s32.totalorder %s344, %s360
      %p362 = scmp.eq.s32.totalorder %s38, 0
      %p363 = por %p361, %p362
      %s364 = ssub.s32 %s40, %s47
      %p365 = scmp.eq.s32.totalorder %s364, 0
      %s367 = sadd.s32 %s366, 1
      %s368 = scalar_select %p365, %s366, %s367
      %p371 = pneg %p365
      %p372 = scmp.eq.s32.totalorder %s32, 7
      %p373 = por %p371, %p372
      %p374 = scmp.ne.s32.totalorder %s366, %s369
      %p375 = scmp.eq.s32.totalorder %s32, 0
      %p376 = por %p374, %p375
      %p377 = scmp.ne.s32.totalorder %s366, %s369
      %p378 = scmp.eq.s32.totalorder %s37, 7
      %p379 = por %p377, %p378
      %p380 = scmp.ne.s32.totalorder %s369, %s370
      %p381 = scmp.eq.s32.totalorder %s37, 0
      %p382 = por %p380, %p381
      %p383 = scmp.ne.s32.totalorder %s369, %s370
      %p384 = scmp.eq.s32.totalorder %s38, 7
      %p385 = por %p383, %p384
      %p387 = scmp.ne.s32.totalorder %s370, %s386
      %p388 = scmp.eq.s32.totalorder %s38, 0
      %p389 = por %p387, %p388
      %s390 = ssub.s32 %s40, %s47
      %p391 = scmp.eq.s32.totalorder %s390, 0
      %s393 = sadd.s32 %s392, 1
      %s394 = scalar_select %p391, %s392, %s393
      %p397 = pneg %p391
      %p398 = scmp.eq.s32.totalorder %s32, 7
      %p399 = por %p397, %p398
      %p400 = scmp.ne.s32.totalorder %s392, %s395
      %p401 = scmp.eq.s32.totalorder %s32, 0
      %p402 = por %p400, %p401
      %p403 = scmp.ne.s32.totalorder %s392, %s395
      %p404 = scmp.eq.s32.totalorder %s37, 7
      %p405 = por %p403, %p404
      %p406 = scmp.ne.s32.totalorder %s395, %s396
      %p407 = scmp.eq.s32.totalorder %s37, 0
      %p408 = por %p406, %p407
      %p409 = scmp.ne.s32.totalorder %s395, %s396
      %p410 = scmp.eq.s32.totalorder %s38, 7
      %p411 = por %p409, %p410
      %p413 = scmp.ne.s32.totalorder %s396, %s412
      %p414 = scmp.eq.s32.totalorder %s38, 0
      %p415 = por %p413, %p414
      %s416 = ssub.s32 %s39, %s51
      %p417 = scmp.eq.s32.totalorder %s416, 0
      %s419 = sadd.s32 %s418, 1
      %s420 = scalar_select %p417, %s418, %s419
      %p423 = pneg %p417
      %p424 = scmp.eq.s32.totalorder %s32, 7
      %p425 = por %p423, %p424
      %p426 = scmp.ne.s32.totalorder %s418, %s421
      %p427 = scmp.eq.s32.totalorder %s32, 0
      %p428 = por %p426, %p427
      %p429 = scmp.ne.s32.totalorder %s418, %s421
      %p430 = scmp.eq.s32.totalorder %s37, 7
      %p431 = por %p429, %p430
      %p432 = scmp.ne.s32.totalorder %s421, %s422
      %p433 = scmp.eq.s32.totalorder %s37, 0
      %p434 = por %p432, %p433
      %p435 = scmp.ne.s32.totalorder %s421, %s422
      %p436 = scmp.eq.s32.totalorder %s38, 7
      %p437 = por %p435, %p436
      %p439 = scmp.ne.s32.totalorder %s422, %s438
      %p440 = scmp.eq.s32.totalorder %s38, 0
      %p441 = por %p439, %p440
      %p442 = scmp.le.s32.totalorder 1, %s32
      %p443 = scmp.lt.s32.totalorder %s32, 9
      %p444 = pnand %p442, %p443
      %p445 = pneg %p444
      // Predicated region
      $region9: #{tpu_custom_call.1} parent=5 // pred_check
        _
      $region10: #{tpu_custom_call.1} parent=5 // pred_check_branch
        %447 = sbr.rel (%p444) target = $region12
      $region11: #{tpu_custom_call.1} parent=5 // pred_region
        %s448 = ssub.s32 %s32, 1
      $region12: #{tpu_custom_call.1} parent=5 // pred_fallthru
        _
      %p449 = scmp.lt.s32.totalorder %s32, 8
      // Predicated region
      $region13: #{tpu_custom_call.1} parent=5 // pred_check
        %p450 = pneg %p449
      $region14: #{tpu_custom_call.1} parent=5 // pred_check_branch
        %452 = sbr.rel (%p450) target = $region16
      $region15: #{tpu_custom_call.1} parent=5 // pred_region
        // Predicated region
        $region17: #{tpu_custom_call.1} parent=15 // pred_check
          %p453 = pneg %p64
        $region18: #{tpu_custom_call.1} parent=15 // pred_check_branch
          %455 = sbr.rel (%p453) target = $region20
        $region19: #{tpu_custom_call.1} parent=15 // pred_region
          %p456 = scmp.lt.s32.totalorder %s39, 3
          %s457 = scalar_select %p456, %s39, 3
          %s458 = smul.addr %s457, 8
          %s459 = scalar_lea.vmem %s0, %s458
        $region20: #{tpu_custom_call.1} parent=15 // pred_fallthru
          _
        // Predicated region
        $region21: #{tpu_custom_call.1} parent=15 // pred_check
          %p460 = pneg %p90
        $region22: #{tpu_custom_call.1} parent=15 // pred_check_branch
          %462 = sbr.rel (%p460) target = $region24
        $region23: #{tpu_custom_call.1} parent=15 // pred_region
          %s463 = sand.u32 %s80, 1
          %s464 = scalar_lea.sflag [#allocation4], %s463
          %s465 = sand.u32 %s80, 1
          %s466 = scalar_lea.vmem [#allocation3], %s465
          %s468 = ssub.s32 16, 16
          %469 = vsyncadd %s464, %s468
          %s470 = smul.addr %s40, 16
          %s471 = scalar_lea.hbm %s1, %s470
          %s473 = sshll.u32 %s466, 4
          %s474 = int_to_ptr.vmem [resolvable:$true] %s473
          %476 = dma.hbm_to_vmem [thread:$0]  %s471, 16, %s474, %s464
        $region24: #{tpu_custom_call.1} parent=15 // pred_fallthru
          _
        // Predicated region
        $region25: #{tpu_custom_call.1} parent=15 // pred_check
          %p477 = pneg %p116
        $region26: #{tpu_custom_call.1} parent=15 // pred_check_branch
          %479 = sbr.rel (%p477) target = $region28
        $region27: #{tpu_custom_call.1} parent=15 // pred_region
          %p480 = scmp.lt.s32.totalorder %s40, 1
          %s481 = scalar_select %p480, %s40, 1
          %s482 = scalar_lea.vmem %s2, %s481
        $region28: #{tpu_custom_call.1} parent=15 // pred_fallthru
          _
        // Predicated region
        $region29: #{tpu_custom_call.1} parent=15 // pred_check
          %p483 = pneg %p142
        $region30: #{tpu_custom_call.1} parent=15 // pred_check_branch
          %485 = sbr.rel (%p483) target = $region32
        $region31: #{tpu_custom_call.1} parent=15 // pred_region
          %p486 = scmp.lt.s32.totalorder %s40, 1
          %s487 = scalar_select %p486, %s40, 1
          %s488 = smul.addr %s487, 4
          %s489 = smul.addr %s488, 4
          %s490 = scalar_lea.vmem %s3, %s489
        $region32: #{tpu_custom_call.1} parent=15 // pred_fallthru
          _
        // Predicated region
        $region33: #{tpu_custom_call.1} parent=15 // pred_check
          %p491 = pneg %p168
        $region34: #{tpu_custom_call.1} parent=15 // pred_check_branch
          %493 = sbr.rel (%p491) target = $region36
        $region35: #{tpu_custom_call.1} parent=15 // pred_region
          %p494 = scmp.lt.s32.totalorder %s40, 1
          %s495 = scalar_select %p494, %s40, 1
          %s496 = smul.addr %s495, 4
          %s497 = smul.addr %s496, 4
          %s498 = scalar_lea.vmem %s4, %s497
        $region36: #{tpu_custom_call.1} parent=15 // pred_fallthru
          _
        // Predicated region
        $region37: #{tpu_custom_call.1} parent=15 // pred_check
          %p499 = pneg %p194
        $region38: #{tpu_custom_call.1} parent=15 // pred_check_branch
          %501 = sbr.rel (%p499) target = $region40
        $region39: #{tpu_custom_call.1} parent=15 // pred_region
          %s502 = sand.u32 %s32, 1
          %s503 = scalar_lea.sflag [#allocation7], %s502
          %s504 = sand.u32 %s184, 1
          %s505 = smul.addr %s504, 16
          %s506 = scalar_lea.vmem [#allocation6], %s505
          %s508 = ssub.s32 256, 256
          %509 = vsyncadd %s503, %s508
          %s510 = smul.addr %s40, 4
          %s511 = smul.addr %s510, 64
          %s512 = scalar_lea.hbm %s5, %s511
          %s513 = sshll.u32 %s506, 4
          %s514 = int_to_ptr.vmem [resolvable:$true] %s513
          %519 = dma.hbm_to_vmem [thread:$0]  %s512, 256, %s514, %s503, 64, 64, 4
        $region40: #{tpu_custom_call.1} parent=15 // pred_fallthru
          _
        // Predicated region
        $region41: #{tpu_custom_call.1} parent=15 // pred_check
          %p520 = pneg %p220
        $region42: #{tpu_custom_call.1} parent=15 // pred_check_branch
          %522 = sbr.rel (%p520) target = $region44
        $region43: #{tpu_custom_call.1} parent=15 // pred_region
          %s523 = sand.u32 %s32, 1
          %s524 = scalar_lea.sflag [#allocation7], %s523
          %s525 = sand.u32 %s210, 1
          %s526 = smul.addr %s525, 16
          %s527 = scalar_lea.vmem [#allocation8], %s526
          %s529 = ssub.s32 256, 256
          %530 = vsyncadd %s524, %s529
          %s531 = smul.addr %s40, 4
          %s532 = smul.addr %s531, 64
          %s533 = scalar_lea.hbm %s6, %s532
          %s534 = sshll.u32 %s527, 4
          %s535 = int_to_ptr.vmem [resolvable:$true] %s534
          %540 = dma.hbm_to_vmem [thread:$0]  %s533, 256, %s535, %s524, 64, 64, 4
        $region44: #{tpu_custom_call.1} parent=15 // pred_fallthru
          _
        // Predicated region
        $region45: #{tpu_custom_call.1} parent=15 // pred_check
          %p541 = pneg %p246
        $region46: #{tpu_custom_call.1} parent=15 // pred_check_branch
          %543 = sbr.rel (%p541) target = $region48
        $region47: #{tpu_custom_call.1} parent=15 // pred_region
          %p544 = scmp.lt.s32.totalorder %s40, 1
          %s545 = scalar_select %p544, %s40, 1
          %s546 = scalar_lea.vmem %s7, %s545
        $region48: #{tpu_custom_call.1} parent=15 // pred_fallthru
          _
        // Predicated region
        $region49: #{tpu_custom_call.1} parent=15 // pred_check
          %p547 = pneg %p272
        $region50: #{tpu_custom_call.1} parent=15 // pred_check_branch
          %549 = sbr.rel (%p547) target = $region52
        $region51: #{tpu_custom_call.1} parent=15 // pred_region
          %p550 = scmp.lt.s32.totalorder %s40, 1
          %s551 = scalar_select %p550, %s40, 1
          %s552 = scalar_lea.vmem %s8, %s551
        $region52: #{tpu_custom_call.1} parent=15 // pred_fallthru
          _
        // Predicated region
        $region53: #{tpu_custom_call.1} parent=15 // pred_check
          %p553 = pneg %p298
        $region54: #{tpu_custom_call.1} parent=15 // pred_check_branch
          %555 = sbr.rel (%p553) target = $region56
        $region55: #{tpu_custom_call.1} parent=15 // pred_region
          %p556 = scmp.lt.s32.totalorder %s40, 1
          %s557 = scalar_select %p556, %s40, 1
          %s558 = scalar_lea.vmem %s9, %s557
        $region56: #{tpu_custom_call.1} parent=15 // pred_fallthru
          _
        // Predicated region
        $region57: #{tpu_custom_call.1} parent=15 // pred_check
          %p559 = pneg %p324
        $region58: #{tpu_custom_call.1} parent=15 // pred_check_branch
          %561 = sbr.rel (%p559) target = $region60
        $region59: #{tpu_custom_call.1} parent=15 // pred_region
          %s562 = sand.u32 %s314, 1
          %s563 = scalar_lea.sflag [#allocation10], %s562
          %s564 = sand.u32 %s314, 1
          %s565 = smul.addr %s564, 16
          %s566 = scalar_lea.vmem [#allocation9], %s565
          %s568 = ssub.s32 256, 256
          %569 = vsyncadd %s563, %s568
          %s570 = smul.addr %s40, 4
          %s571 = smul.addr %s570, 64
          %s572 = scalar_lea.hbm %s10, %s571
          %s573 = sshll.u32 %s566, 4
          %s574 = int_to_ptr.vmem [resolvable:$true] %s573
          %579 = dma.hbm_to_vmem [thread:$0]  %s572, 256, %s574, %s563, 64, 64, 4
        $region60: #{tpu_custom_call.1} parent=15 // pred_fallthru
          _
        // Predicated region
        $region61: #{tpu_custom_call.1} parent=15 // pred_check
          %p580 = pneg %p350
        $region62: #{tpu_custom_call.1} parent=15 // pred_check_branch
          %582 = sbr.rel (%p580) target = $region64
        $region63: #{tpu_custom_call.1} parent=15 // pred_region
          %p583 = scmp.lt.s32.totalorder %s40, 1
          %s584 = scalar_select %p583, %s40, 1
          %s585 = scalar_lea.vmem %s11, %s584
        $region64: #{tpu_custom_call.1} parent=15 // pred_fallthru
          _
        // Predicated region
        $region65: #{tpu_custom_call.1} parent=15 // pred_check
          %p586 = pneg %p376
        $region66: #{tpu_custom_call.1} parent=15 // pred_check_branch
          %588 = sbr.rel (%p586) target = $region68
        $region67: #{tpu_custom_call.1} parent=15 // pred_region
          %p589 = scmp.lt.s32.totalorder %s40, 1
          %s590 = scalar_select %p589, %s40, 1
          %s591 = smul.addr %s590, 8
          %s592 = smul.addr %s591, 4
          %s593 = scalar_lea.vmem %s12, %s592
        $region68: #{tpu_custom_call.1} parent=15 // pred_fallthru
          _
        // Predicated region
        $region69: #{tpu_custom_call.1} parent=15 // pred_check
          %p594 = pneg %p402
        $region70: #{tpu_custom_call.1} parent=15 // pred_check_branch
          %596 = sbr.rel (%p594) target = $region72
        $region71: #{tpu_custom_call.1} parent=15 // pred_region
          %p597 = scmp.lt.s32.totalorder %s40, 1
          %s598 = scalar_select %p597, %s40, 1
          %s599 = scalar_lea.vmem %s13, %s598
        $region72: #{tpu_custom_call.1} parent=15 // pred_fallthru
          _
      $region16: #{tpu_custom_call.1} parent=5 // pred_fallthru
        _
      %p600 = scmp.le.s32.totalorder 1, %s32
      %p601 = scmp.lt.s32.totalorder %s32, 9
      %p602 = pnand %p600, %p601
      %p603 = pneg %p602
      // Predicated region
      $region73: #{tpu_custom_call.1} parent=5 // pred_check
        _
      $region74: #{tpu_custom_call.1} parent=5 // pred_check_branch
        %605 = sbr.rel (%p602) target = $region76
      $region75: #{tpu_custom_call.1} parent=5 // pred_region
        %s606 = ssub.s32 %s32, 1
        %s607 = sand.u32 %s83, 1
        %s608 = scalar_lea.sflag [#allocation4], %s607
        %s609 = sand.u32 %s83, 1
        %s610 = scalar_lea.vmem [#allocation3], %s609
        // Predicated region
        $region77: #{tpu_custom_call.1} parent=75 // pred_check
          %p611 = pneg %p96
        $region78: #{tpu_custom_call.1} parent=75 // pred_check_branch
          %613 = sbr.rel (%p611) target = $region80
        $region79: #{tpu_custom_call.1} parent=75 // pred_region
          %614 = dma.done %s608, 16
        $region80: #{tpu_custom_call.1} parent=75 // pred_fallthru
          _
        %s615 = sand.u32 %s37, 1
        %s616 = scalar_lea.sflag [#allocation7], %s615
        %s617 = sand.u32 %s187, 1
        %s618 = smul.addr %s617, 16
        %s619 = scalar_lea.vmem [#allocation6], %s618
        // Predicated region
        $region81: #{tpu_custom_call.1} parent=75 // pred_check
          %p620 = pneg %p200
        $region82: #{tpu_custom_call.1} parent=75 // pred_check_branch
          %622 = sbr.rel (%p620) target = $region84
        $region83: #{tpu_custom_call.1} parent=75 // pred_region
          %623 = dma.done %s616, 256
        $region84: #{tpu_custom_call.1} parent=75 // pred_fallthru
          _
        %s624 = sand.u32 %s37, 1
        %s625 = scalar_lea.sflag [#allocation7], %s624
        %s626 = sand.u32 %s213, 1
        %s627 = smul.addr %s626, 16
        %s628 = scalar_lea.vmem [#allocation8], %s627
        // Predicated region
        $region85: #{tpu_custom_call.1} parent=75 // pred_check
          %p629 = pneg %p226
        $region86: #{tpu_custom_call.1} parent=75 // pred_check_branch
          %631 = sbr.rel (%p629) target = $region88
        $region87: #{tpu_custom_call.1} parent=75 // pred_region
          %632 = dma.done %s625, 256
        $region88: #{tpu_custom_call.1} parent=75 // pred_fallthru
          _
        %s633 = sand.u32 %s317, 1
        %s634 = scalar_lea.sflag [#allocation10], %s633
        %s635 = sand.u32 %s317, 1
        %s636 = smul.addr %s635, 16
        %s637 = scalar_lea.vmem [#allocation9], %s636
        // Predicated region
        $region89: #{tpu_custom_call.1} parent=75 // pred_check
          %p638 = pneg %p330
        $region90: #{tpu_custom_call.1} parent=75 // pred_check_branch
          %640 = sbr.rel (%p638) target = $region92
        $region91: #{tpu_custom_call.1} parent=75 // pred_region
          %641 = dma.done %s634, 256
        $region92: #{tpu_custom_call.1} parent=75 // pred_fallthru
          _
        %p642 = scmp.lt.s32.totalorder %s41, 3
        %s643 = scalar_select %p642, %s41, 3
        %s644 = smul.addr %s643, 8
        %s645 = scalar_lea.vmem %s0, %s644
        %p646 = pneg %p70
        %p647 = pneg %p67
        %s648 = sand.u32 %s83, 1
        %s649 = scalar_lea.sflag [#allocation4], %s648
        %s650 = sand.u32 %s83, 1
        %s651 = scalar_lea.vmem [#allocation3], %s650
        %p652 = pneg %p96
        %p653 = pneg %p93
        %p654 = scmp.lt.s32.totalorder %s42, 1
        %s655 = scalar_select %p654, %s42, 1
        %s656 = scalar_lea.vmem %s2, %s655
        %p657 = pneg %p122
        %p658 = pneg %p119
        %p659 = scmp.lt.s32.totalorder %s42, 1
        %s660 = scalar_select %p659, %s42, 1
        %s661 = smul.addr %s660, 4
        %s662 = smul.addr %s661, 4
        %s663 = scalar_lea.vmem %s3, %s662
        %p664 = pneg %p148
        %p665 = pneg %p145
        %p666 = scmp.lt.s32.totalorder %s42, 1
        %s667 = scalar_select %p666, %s42, 1
        %s668 = smul.addr %s667, 4
        %s669 = smul.addr %s668, 4
        %s670 = scalar_lea.vmem %s4, %s669
        %p671 = pneg %p174
        %p672 = pneg %p171
        %s673 = sand.u32 %s37, 1
        %s674 = scalar_lea.sflag [#allocation7], %s673
        %s675 = sand.u32 %s187, 1
        %s676 = smul.addr %s675, 16
        %s677 = scalar_lea.vmem [#allocation6], %s676
        %p678 = pneg %p200
        %p679 = pneg %p197
        %s680 = sand.u32 %s37, 1
        %s681 = scalar_lea.sflag [#allocation7], %s680
        %s682 = sand.u32 %s213, 1
        %s683 = smul.addr %s682, 16
        %s684 = scalar_lea.vmem [#allocation8], %s683
        %p685 = pneg %p226
        %p686 = pneg %p223
        %p687 = scmp.lt.s32.totalorder %s42, 1
        %s688 = scalar_select %p687, %s42, 1
        %s689 = scalar_lea.vmem %s7, %s688
        %p690 = pneg %p252
        %p691 = pneg %p249
        %p692 = scmp.lt.s32.totalorder %s42, 1
        %s693 = scalar_select %p692, %s42, 1
        %s694 = scalar_lea.vmem %s8, %s693
        %p695 = pneg %p278
        %p696 = pneg %p275
        %p697 = scmp.lt.s32.totalorder %s42, 1
        %s698 = scalar_select %p697, %s42, 1
        %s699 = scalar_lea.vmem %s9, %s698
        %p700 = pneg %p304
        %p701 = pneg %p301
        %s702 = sand.u32 %s317, 1
        %s703 = scalar_lea.sflag [#allocation10], %s702
        %s704 = sand.u32 %s317, 1
        %s705 = smul.addr %s704, 16
        %s706 = scalar_lea.vmem [#allocation9], %s705
        %p707 = pneg %p330
        %p708 = pneg %p327
        %p709 = scmp.lt.s32.totalorder %s42, 1
        %s710 = scalar_select %p709, %s42, 1
        %s711 = scalar_lea.vmem %s11, %s710
        %p712 = pneg %p356
        %p713 = pneg %p353
        %p714 = scmp.lt.s32.totalorder %s42, 1
        %s715 = scalar_select %p714, %s42, 1
        %s716 = smul.addr %s715, 8
        %s717 = smul.addr %s716, 4
        %s718 = scalar_lea.vmem %s12, %s717
        %p719 = pneg %p382
        %p720 = pneg %p379
        %p721 = scmp.lt.s32.totalorder %s42, 1
        %s722 = scalar_select %p721, %s42, 1
        %s723 = scalar_lea.vmem %s13, %s722
        %p724 = pneg %p408
        %p725 = pneg %p405
        %p726 = pneg %p434
        %p727 = pneg %p431
        %s728 = sand.u32 %s421, 1
        %s729 = scalar_lea.sflag [#allocation5], %s728
        %s730 = sand.u32 %s421, 1
        %s731 = smul.addr %s730, 8
        %s732 = scalar_lea.vmem [#allocation11], %s731
        %p733 = scmp.lt.s32.totalorder %s41, 3
        %s734 = scalar_select %p733, %s41, 3
        %s735 = smul.addr %s734, 8
        %s736 = scalar_lea.vmem %s0, %s735
        %p737 = scmp.lt.s32.totalorder %s42, 1
        %s738 = scalar_select %p737, %s42, 1
        %s739 = scalar_lea.vmem %s2, %s738
        %p740 = scmp.lt.s32.totalorder %s42, 1
        %s741 = scalar_select %p740, %s42, 1
        %s742 = smul.addr %s741, 4
        %s743 = smul.addr %s742, 4
        %s744 = scalar_lea.vmem %s3, %s743
        %p745 = scmp.lt.s32.totalorder %s42, 1
        %s746 = scalar_select %p745, %s42, 1
        %s747 = smul.addr %s746, 4
        %s748 = smul.addr %s747, 4
        %s749 = scalar_lea.vmem %s4, %s748
        %p750 = scmp.lt.s32.totalorder %s42, 1
        %s751 = scalar_select %p750, %s42, 1
        %s752 = scalar_lea.vmem %s7, %s751
        %p753 = scmp.lt.s32.totalorder %s42, 1
        %s754 = scalar_select %p753, %s42, 1
        %s755 = scalar_lea.vmem %s8, %s754
        %p756 = scmp.lt.s32.totalorder %s42, 1
        %s757 = scalar_select %p756, %s42, 1
        %s758 = scalar_lea.vmem %s9, %s757
        %p759 = scmp.lt.s32.totalorder %s42, 1
        %s760 = scalar_select %p759, %s42, 1
        %s761 = scalar_lea.vmem %s11, %s760
        %p762 = scmp.lt.s32.totalorder %s42, 1
        %s763 = scalar_select %p762, %s42, 1
        %s764 = smul.addr %s763, 8
        %s765 = smul.addr %s764, 4
        %s766 = scalar_lea.vmem %s12, %s765
        %p767 = scmp.lt.s32.totalorder %s42, 1
        %s768 = scalar_select %p767, %s42, 1
        %s769 = scalar_lea.vmem %s13, %s768
        %p771 = scmp.eq.s32.totalorder %s42, 0
        // Predicated region
        $region93: #{tpu_custom_call.1} parent=75 // pred_check
          %p772 = pneg %p771
        $region94: #{tpu_custom_call.1} parent=75 // pred_check_branch
          %774 = sbr.rel (%p772) target = $region96
        $region95: #{tpu_custom_call.1} parent=75 // pred_region
          %v775 = vld [vmem:[%s736] sm:$0xff]
          %vm776 = vcmask 261120
          %777 = vst.msk [vmem:[#allocation2] sm:$0xff] %vm776, %v775
        $region96: #{tpu_custom_call.1} parent=75 // pred_fallthru
          _
        %v778 = vld [vmem:[#allocation2] sm:$0xff]
        %v779 = vld [vmem:[%s610] sm:$0x1]
        %v780 = vld [vmem:[%s739] sm:$0x1]
        %vm781 = vcmask 261120
        %v782 = vsel %vm781, %v778, 0.0
        %783 = vadd.xlane.f32.xlu0 %v782
        %v784 = vpop.xlane.xlu0 %783
        %v785 = vrcp.pop 32.0
        %v786 = vmul.f32 %v784, %v785
        %v787 = vsub.f32 %v778, %v786
        %v788 = vmul.f32 %v787, %v787
        %v789 = vsel %vm781, %v788, 0.0
        %790 = vadd.xlane.f32.xlu0 %v789
        %v791 = vpop.xlane.xlu0 %790
        %v792 = vmul.f32 %v791, %v785
        %v793 = vadd.f32 %v792, 1e-05
        %v794 = vrsqrt.pop %v793
        %v795 = vmul.f32 %v787, %v794
        %v797 = vlaneseq
        %v798 = vshrl.u32 %v797, 7
        %v799 = vsub.s32 0, %v798
        %v800 = vrot.slane %v779, %v799
        %v802 = vmul.f32 %v795, %v800
        %v804 = vlaneseq
        %v805 = vshrl.u32 %v804, 7
        %v806 = vsub.s32 0, %v805
        %v807 = vrot.slane %v780, %v806
        %v809 = vadd.f32 %v802, %v807
        %v810 = vpack.c.bf16 %v809, %v809
        %v811 = vld [vmem:[%s744] sm:$0xf]
        %v812 = vld [vmem:[%s744 + $0x4] sm:$0xf]
        %v813 = vld [vmem:[%s744 + $0x8] sm:$0xf]
        %v814 = vld [vmem:[%s744 + $0xc] sm:$0xf]
        %v819 = vunpack.c.l.b16 %v811
        %v820 = vunpack.c.l.b16 %v812
        %v821 = vunpack.c.l.b16 %v813
        %v822 = vunpack.c.l.b16 %v814
        %v823 = vpack.c.b16 %v820, %v819
        %v824 = vpack.c.b16 %v822, %v821
        %v828 = vsel %vm781, %v810, 0
        %830 = vmatprep.subr.bf16.mxu0 0
        %831 = vmatpush1.bf16.msra.mxu0 0
        %832 = vmatprep.subr.bf16.mxu0 0
        %833 = vmatpush1.bf16.msra.mxu0 0
        %834 = vmatprep.subr.bf16.mxu0 0
        %835 = vmatpush1.bf16.msra.mxu0 0
        %836 = vmatprep.subr.bf16.mxu0 0
        %837 = vmatpush1.bf16.msra.mxu0 0
        %838 = vmatprep.subr.bf16.mxu0 0
        %839 = vmatpush1.bf16.msra.mxu0 0
        %840 = vmatprep.subr.bf16.mxu0 0
        %841 = vmatpush1.bf16.msra.mxu0 0
        %842 = vmatprep.subr.bf16.mxu0 0
        %843 = vmatpush1.bf16.msra.mxu0 %v824
        %844 = vmatprep.subr.bf16.mxu0 0
        %845 = vmatpush1.bf16.msra.mxu0 %v823
        %846 = vmatprep.subr.bf16.mxu0 0
        %847 = vmatpush2.bf16.msra.mxu0 0
        %848 = vmatprep.subr.bf16.mxu0 0
        %849 = vmatpush2.bf16.msra.mxu0 0
        %850 = vmatprep.subr.bf16.mxu0 0
        %851 = vmatpush2.bf16.msra.mxu0 0
        %852 = vmatprep.subr.bf16.mxu0 0
        %853 = vmatpush2.bf16.msra.mxu0 0
        %854 = vmatprep.subr.bf16.mxu0 0
        %855 = vmatpush2.bf16.msra.mxu0 0
        %856 = vmatprep.subr.bf16.mxu0 0
        %857 = vmatpush2.bf16.msra.mxu0 0
        %858 = vmatprep.subr.bf16.mxu0 0
        %859 = vmatpush2.bf16.msra.mxu0 0
        %860 = vmatprep.subr.bf16.mxu0 0
        %861 = vmatpush2.bf16.msra.mxu0 0
        %862 = vmatprep.mubr.bf16.mxu0 0
        %863 = vmatmul.mubr.bf16.gmra.mxu0 %v828
        %v864 = vpop.f32.mrf.mxu0
        %v865 = vadd.f32 0.0, %v864
        %v866 = vpop.f32.mrf.mxu0
        %v867 = vpop.f32.mrf.mxu0
        %v868 = vpop.f32.mrf.mxu0
        %869 = vdwg.mxu0
        %v870 = vld [vmem:[%s749] sm:$0xf]
        %v871 = vld [vmem:[%s749 + $0x4] sm:$0xf]
        %v872 = vld [vmem:[%s749 + $0x8] sm:$0xf]
        %v873 = vld [vmem:[%s749 + $0xc] sm:$0xf]
        %v878 = vunpack.c.l.b16 %v870
        %v879 = vunpack.c.l.b16 %v871
        %v880 = vunpack.c.l.b16 %v872
        %v881 = vunpack.c.l.b16 %v873
        %v882 = vpack.c.b16 %v879, %v878
        %v883 = vpack.c.b16 %v881, %v880
        %886 = vmatprep.subr.bf16.mxu0 0
        %887 = vmatpush1.bf16.msra.mxu0 0
        %888 = vmatprep.subr.bf16.mxu0 0
        %889 = vmatpush1.bf16.msra.mxu0 0
        %890 = vmatprep.subr.bf16.mxu0 0
        %891 = vmatpush1.bf16.msra.mxu0 0
        %892 = vmatprep.subr.bf16.mxu0 0
        %893 = vmatpush1.bf16.msra.mxu0 0
        %894 = vmatprep.subr.bf16.mxu0 0
        %895 = vmatpush1.bf16.msra.mxu0 0
        %896 = vmatprep.subr.bf16.mxu0 0
        %897 = vmatpush1.bf16.msra.mxu0 0
        %898 = vmatprep.subr.bf16.mxu0 0
        %899 = vmatpush1.bf16.msra.mxu0 %v883
        %900 = vmatprep.subr.bf16.mxu0 0
        %901 = vmatpush1.bf16.msra.mxu0 %v882
        %902 = vmatprep.subr.bf16.mxu0 0
        %903 = vmatpush2.bf16.msra.mxu0 0
        %904 = vmatprep.subr.bf16.mxu0 0
        %905 = vmatpush2.bf16.msra.mxu0 0
        %906 = vmatprep.subr.bf16.mxu0 0
        %907 = vmatpush2.bf16.msra.mxu0 0
        %908 = vmatprep.subr.bf16.mxu0 0
        %909 = vmatpush2.bf16.msra.mxu0 0
        %910 = vmatprep.subr.bf16.mxu0 0
        %911 = vmatpush2.bf16.msra.mxu0 0
        %912 = vmatprep.subr.bf16.mxu0 0
        %913 = vmatpush2.bf16.msra.mxu0 0
        %914 = vmatprep.subr.bf16.mxu0 0
        %915 = vmatpush2.bf16.msra.mxu0 0
        %916 = vmatprep.subr.bf16.mxu0 0
        %917 = vmatpush2.bf16.msra.mxu0 0
        %918 = vmatprep.mubr.bf16.mxu0 0
        %919 = vmatmul.mubr.bf16.gmra.mxu0 %v828
        %v920 = vpop.f32.mrf.mxu0
        %v921 = vadd.f32 0.0, %v920
        %v922 = vpop.f32.mrf.mxu0
        %v923 = vpop.f32.mrf.mxu0
        %v924 = vpop.f32.mrf.mxu0
        %925 = vdwg.mxu0
        %v926 = vld [vmem:[%s619] sm:$0xf]
        %v927 = vld [vmem:[%s619 + $0x4] sm:$0xf]
        %v928 = vld [vmem:[%s619 + $0x8] sm:$0xf]
        %v929 = vld [vmem:[%s619 + $0xc] sm:$0xf]
        %v934 = vunpack.c.l.b16 %v926
        %v935 = vunpack.c.l.b16 %v927
        %v936 = vunpack.c.l.b16 %v928
        %v937 = vunpack.c.l.b16 %v929
        %v938 = vpack.c.b16 %v935, %v934
        %v939 = vpack.c.b16 %v937, %v936
        %942 = vmatprep.subr.bf16.mxu0 0
        %943 = vmatpush1.bf16.msra.mxu0 0
        %944 = vmatprep.subr.bf16.mxu0 0
        %945 = vmatpush1.bf16.msra.mxu0 0
        %946 = vmatprep.subr.bf16.mxu0 0
        %947 = vmatpush1.bf16.msra.mxu0 0
        %948 = vmatprep.subr.bf16.mxu0 0
        %949 = vmatpush1.bf16.msra.mxu0 0
        %950 = vmatprep.subr.bf16.mxu0 0
        %951 = vmatpush1.bf16.msra.mxu0 0
        %952 = vmatprep.subr.bf16.mxu0 0
        %953 = vmatpush1.bf16.msra.mxu0 0
        %954 = vmatprep.subr.bf16.mxu0 0
        %955 = vmatpush1.bf16.msra.mxu0 %v939
        %956 = vmatprep.subr.bf16.mxu0 0
        %957 = vmatpush1.bf16.msra.mxu0 %v938
        %958 = vmatprep.subr.bf16.mxu0 0
        %959 = vmatpush2.bf16.msra.mxu0 0
        %960 = vmatprep.subr.bf16.mxu0 0
        %961 = vmatpush2.bf16.msra.mxu0 0
        %962 = vmatprep.subr.bf16.mxu0 0
        %963 = vmatpush2.bf16.msra.mxu0 0
        %964 = vmatprep.subr.bf16.mxu0 0
        %965 = vmatpush2.bf16.msra.mxu0 0
        %966 = vmatprep.subr.bf16.mxu0 0
        %967 = vmatpush2.bf16.msra.mxu0 0
        %968 = vmatprep.subr.bf16.mxu0 0
        %969 = vmatpush2.bf16.msra.mxu0 0
        %970 = vmatprep.subr.bf16.mxu0 0
        %971 = vmatpush2.bf16.msra.mxu0 0
        %972 = vmatprep.subr.bf16.mxu0 0
        %973 = vmatpush2.bf16.msra.mxu0 0
        %974 = vmatprep.mubr.bf16.mxu0 0
        %975 = vmatmul.mubr.bf16.gmra.mxu0 %v828
        %v976 = vpop.f32.mrf.mxu0
        %v977 = vadd.f32 0.0, %v976
        %v978 = vpop.f32.mrf.mxu0
        %v979 = vpop.f32.mrf.mxu0
        %v980 = vpop.f32.mrf.mxu0
        %981 = vdwg.mxu0
        %983 = vrot.lane.b32.xlu0 %v865, 120
        %v984 = vpop.permute.xlu0 %983
        %986 = vrot.lane.b32.xlu0 %v865, 112
        %v987 = vpop.permute.xlu0 %986
        %989 = vrot.lane.b32.xlu0 %v865, 104
        %v990 = vpop.permute.xlu0 %989
        %v992 = vcombine.low %v865, %v987
        %v993 = vcombine.high %v865, %v987
        %v995 = vunpack.c.l.s4 1983009808
        %v996 = vunpack.c.0.s8 %v995
        %v997 = vlaneseq
        %v998 = vshrl.u32 %v997, 7
        %v999 = vsub.s32 %v996, %v998
        %v1000 = vrot.slane %v992, %v999
        %v1002 = vunpack.c.l.s4 1983009808
        %v1003 = vunpack.c.0.s8 %v1002
        %v1004 = vlaneseq
        %v1005 = vshrl.u32 %v1004, 7
        %v1006 = vsub.s32 %v1003, %v1005
        %v1007 = vrot.slane %v993, %v1006
        %v1008 = vcombine.low %v984, %v990
        %v1009 = vcombine.high %v984, %v990
        %v1011 = vunpack.c.l.s4 1983009808
        %v1012 = vunpack.c.0.s8 %v1011
        %v1013 = vlaneseq
        %v1014 = vshrl.u32 %v1013, 7
        %v1015 = vsub.s32 %v1012, %v1014
        %v1016 = vrot.slane %v1008, %v1015
        %v1018 = vunpack.c.l.s4 1983009808
        %v1019 = vunpack.c.0.s8 %v1018
        %v1020 = vlaneseq
        %v1021 = vshrl.u32 %v1020, 7
        %v1022 = vsub.s32 %v1019, %v1021
        %v1023 = vrot.slane %v1009, %v1022
        %v1024 = vcombine.low %v1000, %v1016
        %v1025 = vcombine.high %v1000, %v1016
        %v1027 = vunpack.c.l.s4 1934713408
        %v1028 = vunpack.c.0.s8 %v1027
        %v1029 = vlaneseq
        %v1030 = vshrl.u32 %v1029, 7
        %v1031 = vsub.s32 %v1028, %v1030
        %v1032 = vrot.slane %v1024, %v1031
        %v1034 = vunpack.c.l.s4 1934713408
        %v1035 = vunpack.c.0.s8 %v1034
        %v1036 = vlaneseq
        %v1037 = vshrl.u32 %v1036, 7
        %v1038 = vsub.s32 %v1035, %v1037
        %v1039 = vrot.slane %v1025, %v1038
        %v1040 = vcombine.low %v1007, %v1023
        %v1041 = vcombine.high %v1007, %v1023
        %v1043 = vunpack.c.l.s4 1934713408
        %v1044 = vunpack.c.0.s8 %v1043
        %v1045 = vlaneseq
        %v1046 = vshrl.u32 %v1045, 7
        %v1047 = vsub.s32 %v1044, %v1046
        %v1048 = vrot.slane %v1040, %v1047
        %v1050 = vunpack.c.l.s4 1934713408
        %v1051 = vunpack.c.0.s8 %v1050
        %v1052 = vlaneseq
        %v1053 = vshrl.u32 %v1052, 7
        %v1054 = vsub.s32 %v1051, %v1053
        %v1055 = vrot.slane %v1041, %v1054
        %v1056 = vcombine.high %v1032, 0.0
        %v1057 = vcombine.high %v1039, 0.0
        %v1058 = vcombine.high %v1048, 0.0
        %v1059 = vcombine.high %v1055, 0.0
        %v1060 = vcombine.low %v1032, %v1039
        %v1062 = vunpack.c.l.s4 1983009808
        %v1063 = vunpack.c.0.s8 %v1062
        %v1064 = vlaneseq
        %v1065 = vshrl.u32 %v1064, 7
        %v1066 = vsub.s32 %v1063, %v1065
        %v1067 = vrot.slane %v1060, %v1066
        %v1068 = vcombine.low %v1056, %v1057
        %v1070 = vunpack.c.l.s4 1983009808
        %v1071 = vunpack.c.0.s8 %v1070
        %v1072 = vlaneseq
        %v1073 = vshrl.u32 %v1072, 7
        %v1074 = vsub.s32 %v1071, %v1073
        %v1075 = vrot.slane %v1068, %v1074
        %v1076 = vcombine.low %v1048, %v1055
        %v1078 = vunpack.c.l.s4 1983009808
        %v1079 = vunpack.c.0.s8 %v1078
        %v1080 = vlaneseq
        %v1081 = vshrl.u32 %v1080, 7
        %v1082 = vsub.s32 %v1079, %v1081
        %v1083 = vrot.slane %v1076, %v1082
        %v1084 = vcombine.low %v1058, %v1059
        %v1086 = vunpack.c.l.s4 1983009808
        %v1087 = vunpack.c.0.s8 %v1086
        %v1088 = vlaneseq
        %v1089 = vshrl.u32 %v1088, 7
        %v1090 = vsub.s32 %v1087, %v1089
        %v1091 = vrot.slane %v1084, %v1090
        %v1092 = vcombine.low %v1067, %v1075
        %v1093 = vcombine.high %v1067, %v1075
        %v1095 = vunpack.c.l.s4 1934713408
        %v1096 = vunpack.c.0.s8 %v1095
        %v1097 = vlaneseq
        %v1098 = vshrl.u32 %v1097, 7
        %v1099 = vsub.s32 %v1096, %v1098
        %v1100 = vrot.slane %v1092, %v1099
        %v1102 = vunpack.c.l.s4 1934713408
        %v1103 = vunpack.c.0.s8 %v1102
        %v1104 = vlaneseq
        %v1105 = vshrl.u32 %v1104, 7
        %v1106 = vsub.s32 %v1103, %v1105
        %v1107 = vrot.slane %v1093, %v1106
        %v1108 = vcombine.low %v1083, %v1091
        %v1109 = vcombine.high %v1083, %v1091
        %v1111 = vunpack.c.l.s4 1934713408
        %v1112 = vunpack.c.0.s8 %v1111
        %v1113 = vlaneseq
        %v1114 = vshrl.u32 %v1113, 7
        %v1115 = vsub.s32 %v1112, %v1114
        %v1116 = vrot.slane %v1108, %v1115
        %v1118 = vunpack.c.l.s4 1934713408
        %v1119 = vunpack.c.0.s8 %v1118
        %v1120 = vlaneseq
        %v1121 = vshrl.u32 %v1120, 7
        %v1122 = vsub.s32 %v1119, %v1121
        %v1123 = vrot.slane %v1109, %v1122
        %v1124 = vcombine.low %v1100, %v1116
        %v1125 = vcombine.high %v1100, %v1116
        %v1126 = vcombine.low %v1107, %v1123
        %v1127 = vcombine.high %v1107, %v1123
        %v1128 = vpack.c.bf16 %v1124, %v1124
        %v1129 = vpack.c.bf16 %v1125, %v1125
        %v1130 = vpack.c.bf16 %v1126, %v1126
        %v1131 = vpack.c.bf16 %v1127, %v1127
        %1133 = vrot.lane.b32.xlu0 %v921, 120
        %v1134 = vpop.permute.xlu0 %1133
        %1136 = vrot.lane.b32.xlu0 %v921, 112
        %v1137 = vpop.permute.xlu0 %1136
        %1139 = vrot.lane.b32.xlu0 %v921, 104
        %v1140 = vpop.permute.xlu0 %1139
        %v1142 = vcombine.low %v921, %v1137
        %v1143 = vcombine.high %v921, %v1137
        %v1145 = vunpack.c.l.s4 1983009808
        %v1146 = vunpack.c.0.s8 %v1145
        %v1147 = vlaneseq
        %v1148 = vshrl.u32 %v1147, 7
        %v1149 = vsub.s32 %v1146, %v1148
        %v1150 = vrot.slane %v1142, %v1149
        %v1152 = vunpack.c.l.s4 1983009808
        %v1153 = vunpack.c.0.s8 %v1152
        %v1154 = vlaneseq
        %v1155 = vshrl.u32 %v1154, 7
        %v1156 = vsub.s32 %v1153, %v1155
        %v1157 = vrot.slane %v1143, %v1156
        %v1158 = vcombine.low %v1134, %v1140
        %v1159 = vcombine.high %v1134, %v1140
        %v1161 = vunpack.c.l.s4 1983009808
        %v1162 = vunpack.c.0.s8 %v1161
        %v1163 = vlaneseq
        %v1164 = vshrl.u32 %v1163, 7
        %v1165 = vsub.s32 %v1162, %v1164
        %v1166 = vrot.slane %v1158, %v1165
        %v1168 = vunpack.c.l.s4 1983009808
        %v1169 = vunpack.c.0.s8 %v1168
        %v1170 = vlaneseq
        %v1171 = vshrl.u32 %v1170, 7
        %v1172 = vsub.s32 %v1169, %v1171
        %v1173 = vrot.slane %v1159, %v1172
        %v1174 = vcombine.low %v1150, %v1166
        %v1175 = vcombine.high %v1150, %v1166
        %v1177 = vunpack.c.l.s4 1934713408
        %v1178 = vunpack.c.0.s8 %v1177
        %v1179 = vlaneseq
        %v1180 = vshrl.u32 %v1179, 7
        %v1181 = vsub.s32 %v1178, %v1180
        %v1182 = vrot.slane %v1174, %v1181
        %v1184 = vunpack.c.l.s4 1934713408
        %v1185 = vunpack.c.0.s8 %v1184
        %v1186 = vlaneseq
        %v1187 = vshrl.u32 %v1186, 7
        %v1188 = vsub.s32 %v1185, %v1187
        %v1189 = vrot.slane %v1175, %v1188
        %v1190 = vcombine.low %v1157, %v1173
        %v1191 = vcombine.high %v1157, %v1173
        %v1193 = vunpack.c.l.s4 1934713408
        %v1194 = vunpack.c.0.s8 %v1193
        %v1195 = vlaneseq
        %v1196 = vshrl.u32 %v1195, 7
        %v1197 = vsub.s32 %v1194, %v1196
        %v1198 = vrot.slane %v1190, %v1197
        %v1200 = vunpack.c.l.s4 1934713408
        %v1201 = vunpack.c.0.s8 %v1200
        %v1202 = vlaneseq
        %v1203 = vshrl.u32 %v1202, 7
        %v1204 = vsub.s32 %v1201, %v1203
        %v1205 = vrot.slane %v1191, %v1204
        %v1206 = vcombine.high %v1182, 0.0
        %v1207 = vcombine.high %v1189, 0.0
        %v1208 = vcombine.high %v1198, 0.0
        %v1209 = vcombine.high %v1205, 0.0
        %v1210 = vcombine.low %v1182, %v1189
        %v1212 = vunpack.c.l.s4 1983009808
        %v1213 = vunpack.c.0.s8 %v1212
        %v1214 = vlaneseq
        %v1215 = vshrl.u32 %v1214, 7
        %v1216 = vsub.s32 %v1213, %v1215
        %v1217 = vrot.slane %v1210, %v1216
        %v1218 = vcombine.low %v1206, %v1207
        %v1220 = vunpack.c.l.s4 1983009808
        %v1221 = vunpack.c.0.s8 %v1220
        %v1222 = vlaneseq
        %v1223 = vshrl.u32 %v1222, 7
        %v1224 = vsub.s32 %v1221, %v1223
        %v1225 = vrot.slane %v1218, %v1224
        %v1226 = vcombine.low %v1198, %v1205
        %v1228 = vunpack.c.l.s4 1983009808
        %v1229 = vunpack.c.0.s8 %v1228
        %v1230 = vlaneseq
        %v1231 = vshrl.u32 %v1230, 7
        %v1232 = vsub.s32 %v1229, %v1231
        %v1233 = vrot.slane %v1226, %v1232
        %v1234 = vcombine.low %v1208, %v1209
        %v1236 = vunpack.c.l.s4 1983009808
        %v1237 = vunpack.c.0.s8 %v1236
        %v1238 = vlaneseq
        %v1239 = vshrl.u32 %v1238, 7
        %v1240 = vsub.s32 %v1237, %v1239
        %v1241 = vrot.slane %v1234, %v1240
        %v1242 = vcombine.low %v1217, %v1225
        %v1243 = vcombine.high %v1217, %v1225
        %v1245 = vunpack.c.l.s4 1934713408
        %v1246 = vunpack.c.0.s8 %v1245
        %v1247 = vlaneseq
        %v1248 = vshrl.u32 %v1247, 7
        %v1249 = vsub.s32 %v1246, %v1248
        %v1250 = vrot.slane %v1242, %v1249
        %v1252 = vunpack.c.l.s4 1934713408
        %v1253 = vunpack.c.0.s8 %v1252
        %v1254 = vlaneseq
        %v1255 = vshrl.u32 %v1254, 7
        %v1256 = vsub.s32 %v1253, %v1255
        %v1257 = vrot.slane %v1243, %v1256
        %v1258 = vcombine.low %v1233, %v1241
        %v1259 = vcombine.high %v1233, %v1241
        %v1261 = vunpack.c.l.s4 1934713408
        %v1262 = vunpack.c.0.s8 %v1261
        %v1263 = vlaneseq
        %v1264 = vshrl.u32 %v1263, 7
        %v1265 = vsub.s32 %v1262, %v1264
        %v1266 = vrot.slane %v1258, %v1265
        %v1268 = vunpack.c.l.s4 1934713408
        %v1269 = vunpack.c.0.s8 %v1268
        %v1270 = vlaneseq
        %v1271 = vshrl.u32 %v1270, 7
        %v1272 = vsub.s32 %v1269, %v1271
        %v1273 = vrot.slane %v1259, %v1272
        %v1274 = vcombine.low %v1250, %v1266
        %v1275 = vcombine.high %v1250, %v1266
        %v1276 = vcombine.low %v1257, %v1273
        %v1277 = vcombine.high %v1257, %v1273
        %v1278 = vpack.c.bf16 %v1274, %v1274
        %v1279 = vpack.c.bf16 %v1275, %v1275
        %v1280 = vpack.c.bf16 %v1276, %v1276
        %v1281 = vpack.c.bf16 %v1277, %v1277
        %1283 = vrot.lane.b32.xlu0 %v977, 120
        %v1284 = vpop.permute.xlu0 %1283
        %1286 = vrot.lane.b32.xlu0 %v977, 112
        %v1287 = vpop.permute.xlu0 %1286
        %1289 = vrot.lane.b32.xlu0 %v977, 104
        %v1290 = vpop.permute.xlu0 %1289
        %v1292 = vcombine.low %v977, %v1287
        %v1293 = vcombine.high %v977, %v1287
        %v1295 = vunpack.c.l.s4 1983009808
        %v1296 = vunpack.c.0.s8 %v1295
        %v1297 = vlaneseq
        %v1298 = vshrl.u32 %v1297, 7
        %v1299 = vsub.s32 %v1296, %v1298
        %v1300 = vrot.slane %v1292, %v1299
        %v1302 = vunpack.c.l.s4 1983009808
        %v1303 = vunpack.c.0.s8 %v1302
        %v1304 = vlaneseq
        %v1305 = vshrl.u32 %v1304, 7
        %v1306 = vsub.s32 %v1303, %v1305
        %v1307 = vrot.slane %v1293, %v1306
        %v1308 = vcombine.low %v1284, %v1290
        %v1309 = vcombine.high %v1284, %v1290
        %v1311 = vunpack.c.l.s4 1983009808
        %v1312 = vunpack.c.0.s8 %v1311
        %v1313 = vlaneseq
        %v1314 = vshrl.u32 %v1313, 7
        %v1315 = vsub.s32 %v1312, %v1314
        %v1316 = vrot.slane %v1308, %v1315
        %v1318 = vunpack.c.l.s4 1983009808
        %v1319 = vunpack.c.0.s8 %v1318
        %v1320 = vlaneseq
        %v1321 = vshrl.u32 %v1320, 7
        %v1322 = vsub.s32 %v1319, %v1321
        %v1323 = vrot.slane %v1309, %v1322
        %v1324 = vcombine.low %v1300, %v1316
        %v1325 = vcombine.high %v1300, %v1316
        %v1327 = vunpack.c.l.s4 1934713408
        %v1328 = vunpack.c.0.s8 %v1327
        %v1329 = vlaneseq
        %v1330 = vshrl.u32 %v1329, 7
        %v1331 = vsub.s32 %v1328, %v1330
        %v1332 = vrot.slane %v1324, %v1331
        %v1334 = vunpack.c.l.s4 1934713408
        %v1335 = vunpack.c.0.s8 %v1334
        %v1336 = vlaneseq
        %v1337 = vshrl.u32 %v1336, 7
        %v1338 = vsub.s32 %v1335, %v1337
        %v1339 = vrot.slane %v1325, %v1338
        %v1340 = vcombine.low %v1307, %v1323
        %v1341 = vcombine.high %v1307, %v1323
        %v1343 = vunpack.c.l.s4 1934713408
        %v1344 = vunpack.c.0.s8 %v1343
        %v1345 = vlaneseq
        %v1346 = vshrl.u32 %v1345, 7
        %v1347 = vsub.s32 %v1344, %v1346
        %v1348 = vrot.slane %v1340, %v1347
        %v1350 = vunpack.c.l.s4 1934713408
        %v1351 = vunpack.c.0.s8 %v1350
        %v1352 = vlaneseq
        %v1353 = vshrl.u32 %v1352, 7
        %v1354 = vsub.s32 %v1351, %v1353
        %v1355 = vrot.slane %v1341, %v1354
        %v1356 = vcombine.high %v1332, 0.0
        %v1357 = vcombine.high %v1339, 0.0
        %v1358 = vcombine.high %v1348, 0.0
        %v1359 = vcombine.high %v1355, 0.0
        %v1360 = vcombine.low %v1332, %v1339
        %v1362 = vunpack.c.l.s4 1983009808
        %v1363 = vunpack.c.0.s8 %v1362
        %v1364 = vlaneseq
        %v1365 = vshrl.u32 %v1364, 7
        %v1366 = vsub.s32 %v1363, %v1365
        %v1367 = vrot.slane %v1360, %v1366
        %v1368 = vcombine.low %v1356, %v1357
        %v1370 = vunpack.c.l.s4 1983009808
        %v1371 = vunpack.c.0.s8 %v1370
        %v1372 = vlaneseq
        %v1373 = vshrl.u32 %v1372, 7
        %v1374 = vsub.s32 %v1371, %v1373
        %v1375 = vrot.slane %v1368, %v1374
        %v1376 = vcombine.low %v1348, %v1355
        %v1378 = vunpack.c.l.s4 1983009808
        %v1379 = vunpack.c.0.s8 %v1378
        %v1380 = vlaneseq
        %v1381 = vshrl.u32 %v1380, 7
        %v1382 = vsub.s32 %v1379, %v1381
        %v1383 = vrot.slane %v1376, %v1382
        %v1384 = vcombine.low %v1358, %v1359
        %v1386 = vunpack.c.l.s4 1983009808
        %v1387 = vunpack.c.0.s8 %v1386
        %v1388 = vlaneseq
        %v1389 = vshrl.u32 %v1388, 7
        %v1390 = vsub.s32 %v1387, %v1389
        %v1391 = vrot.slane %v1384, %v1390
        %v1392 = vcombine.low %v1367, %v1375
        %v1393 = vcombine.high %v1367, %v1375
        %v1395 = vunpack.c.l.s4 1934713408
        %v1396 = vunpack.c.0.s8 %v1395
        %v1397 = vlaneseq
        %v1398 = vshrl.u32 %v1397, 7
        %v1399 = vsub.s32 %v1396, %v1398
        %v1400 = vrot.slane %v1392, %v1399
        %v1402 = vunpack.c.l.s4 1934713408
        %v1403 = vunpack.c.0.s8 %v1402
        %v1404 = vlaneseq
        %v1405 = vshrl.u32 %v1404, 7
        %v1406 = vsub.s32 %v1403, %v1405
        %v1407 = vrot.slane %v1393, %v1406
        %v1408 = vcombine.low %v1383, %v1391
        %v1409 = vcombine.high %v1383, %v1391
        %v1411 = vunpack.c.l.s4 1934713408
        %v1412 = vunpack.c.0.s8 %v1411
        %v1413 = vlaneseq
        %v1414 = vshrl.u32 %v1413, 7
        %v1415 = vsub.s32 %v1412, %v1414
        %v1416 = vrot.slane %v1408, %v1415
        %v1418 = vunpack.c.l.s4 1934713408
        %v1419 = vunpack.c.0.s8 %v1418
        %v1420 = vlaneseq
        %v1421 = vshrl.u32 %v1420, 7
        %v1422 = vsub.s32 %v1419, %v1421
        %v1423 = vrot.slane %v1409, %v1422
        %v1424 = vcombine.low %v1400, %v1416
        %v1425 = vcombine.high %v1400, %v1416
        %v1426 = vcombine.low %v1407, %v1423
        %v1427 = vcombine.high %v1407, %v1423
        %v1428 = vpack.c.bf16 %v1424, %v1424
        %v1429 = vpack.c.bf16 %v1425, %v1425
        %v1430 = vpack.c.bf16 %v1426, %v1426
        %v1431 = vpack.c.bf16 %v1427, %v1427
        %vm1432 = vcmask 64512
        %v1434 = vsel %vm1432, %v1128, 0
        %v1437 = vsel %vm1432, %v1278, 0
        %1439 = vmatprep.subr.bf16.mxu0 0
        %1440 = vmatpush1.bf16.xpose.msra.mxu0 0
        %1441 = vmatprep.subr.bf16.mxu0 0
        %1442 = vmatpush1.bf16.xpose.msra.mxu0 0
        %1443 = vmatprep.subr.bf16.mxu0 0
        %1444 = vmatpush1.bf16.xpose.msra.mxu0 0
        %1445 = vmatprep.subr.bf16.mxu0 0
        %1446 = vmatpush1.bf16.xpose.msra.mxu0 0
        %1447 = vmatprep.subr.bf16.mxu0 0
        %1448 = vmatpush1.bf16.xpose.msra.mxu0 0
        %1449 = vmatprep.subr.bf16.mxu0 0
        %1450 = vmatpush1.bf16.xpose.msra.mxu0 0
        %1451 = vmatprep.subr.bf16.mxu0 0
        %1452 = vmatpush1.bf16.xpose.msra.mxu0 0
        %1453 = vmatprep.subr.bf16.mxu0 0
        %1454 = vmatpush1.bf16.xpose.msra.mxu0 %v1437
        %1455 = vmatprep.subr.bf16.mxu0 0
        %1456 = vmatpush2.bf16.xpose.msra.mxu0 0
        %1457 = vmatprep.subr.bf16.mxu0 0
        %1458 = vmatpush2.bf16.xpose.msra.mxu0 0
        %1459 = vmatprep.subr.bf16.mxu0 0
        %1460 = vmatpush2.bf16.xpose.msra.mxu0 0
        %1461 = vmatprep.subr.bf16.mxu0 0
        %1462 = vmatpush2.bf16.xpose.msra.mxu0 0
        %1463 = vmatprep.subr.bf16.mxu0 0
        %1464 = vmatpush2.bf16.xpose.msra.mxu0 0
        %1465 = vmatprep.subr.bf16.mxu0 0
        %1466 = vmatpush2.bf16.xpose.msra.mxu0 0
        %1467 = vmatprep.subr.bf16.mxu0 0
        %1468 = vmatpush2.bf16.xpose.msra.mxu0 0
        %1469 = vmatprep.subr.bf16.mxu0 0
        %1470 = vmatpush2.bf16.xpose.msra.mxu0 0
        %1471 = vmatprep.mubr.bf16.mxu0 0
        %1472 = vmatmul.mubr.bf16.gmra.mxu0 %v1434
        %v1473 = vpop.f32.mrf.mxu0
        %v1474 = vadd.f32 0.0, %v1473
        %v1475 = vpop.f32.mrf.mxu0
        %v1476 = vpop.f32.mrf.mxu0
        %v1477 = vpop.f32.mrf.mxu0
        %1478 = vdwg.mxu0
        %v1480 = vsel %vm1432, %v1129, 0
        %v1483 = vsel %vm1432, %v1279, 0
        %1485 = vmatprep.subr.bf16.mxu0 0
        %1486 = vmatpush1.bf16.xpose.msra.mxu0 0
        %1487 = vmatprep.subr.bf16.mxu0 0
        %1488 = vmatpush1.bf16.xpose.msra.mxu0 0
        %1489 = vmatprep.subr.bf16.mxu0 0
        %1490 = vmatpush1.bf16.xpose.msra.mxu0 0
        %1491 = vmatprep.subr.bf16.mxu0 0
        %1492 = vmatpush1.bf16.xpose.msra.mxu0 0
        %1493 = vmatprep.subr.bf16.mxu0 0
        %1494 = vmatpush1.bf16.xpose.msra.mxu0 0
        %1495 = vmatprep.subr.bf16.mxu0 0
        %1496 = vmatpush1.bf16.xpose.msra.mxu0 0
        %1497 = vmatprep.subr.bf16.mxu0 0
        %1498 = vmatpush1.bf16.xpose.msra.mxu0 0
        %1499 = vmatprep.subr.bf16.mxu0 0
        %1500 = vmatpush1.bf16.xpose.msra.mxu0 %v1483
        %1501 = vmatprep.subr.bf16.mxu0 0
        %1502 = vmatpush2.bf16.xpose.msra.mxu0 0
        %1503 = vmatprep.subr.bf16.mxu0 0
        %1504 = vmatpush2.bf16.xpose.msra.mxu0 0
        %1505 = vmatprep.subr.bf16.mxu0 0
        %1506 = vmatpush2.bf16.xpose.msra.mxu0 0
        %1507 = vmatprep.subr.bf16.mxu0 0
        %1508 = vmatpush2.bf16.xpose.msra.mxu0 0
        %1509 = vmatprep.subr.bf16.mxu0 0
        %1510 = vmatpush2.bf16.xpose.msra.mxu0 0
        %1511 = vmatprep.subr.bf16.mxu0 0
        %1512 = vmatpush2.bf16.xpose.msra.mxu0 0
        %1513 = vmatprep.subr.bf16.mxu0 0
        %1514 = vmatpush2.bf16.xpose.msra.mxu0 0
        %1515 = vmatprep.subr.bf16.mxu0 0
        %1516 = vmatpush2.bf16.xpose.msra.mxu0 0
        %1517 = vmatprep.mubr.bf16.mxu0 0
        %1518 = vmatmul.mubr.bf16.gmra.mxu0 %v1480
        %v1519 = vpop.f32.mrf.mxu0
        %v1520 = vadd.f32 0.0, %v1519
        %v1521 = vpop.f32.mrf.mxu0
        %v1522 = vpop.f32.mrf.mxu0
        %v1523 = vpop.f32.mrf.mxu0
        %1524 = vdwg.mxu0
        %v1526 = vsel %vm1432, %v1130, 0
        %v1529 = vsel %vm1432, %v1280, 0
        %1531 = vmatprep.subr.bf16.mxu0 0
        %1532 = vmatpush1.bf16.xpose.msra.mxu0 0
        %1533 = vmatprep.subr.bf16.mxu0 0
        %1534 = vmatpush1.bf16.xpose.msra.mxu0 0
        %1535 = vmatprep.subr.bf16.mxu0 0
        %1536 = vmatpush1.bf16.xpose.msra.mxu0 0
        %1537 = vmatprep.subr.bf16.mxu0 0
        %1538 = vmatpush1.bf16.xpose.msra.mxu0 0
        %1539 = vmatprep.subr.bf16.mxu0 0
        %1540 = vmatpush1.bf16.xpose.msra.mxu0 0
        %1541 = vmatprep.subr.bf16.mxu0 0
        %1542 = vmatpush1.bf16.xpose.msra.mxu0 0
        %1543 = vmatprep.subr.bf16.mxu0 0
        %1544 = vmatpush1.bf16.xpose.msra.mxu0 0
        %1545 = vmatprep.subr.bf16.mxu0 0
        %1546 = vmatpush1.bf16.xpose.msra.mxu0 %v1529
        %1547 = vmatprep.subr.bf16.mxu0 0
        %1548 = vmatpush2.bf16.xpose.msra.mxu0 0
        %1549 = vmatprep.subr.bf16.mxu0 0
        %1550 = vmatpush2.bf16.xpose.msra.mxu0 0
        %1551 = vmatprep.subr.bf16.mxu0 0
        %1552 = vmatpush2.bf16.xpose.msra.mxu0 0
        %1553 = vmatprep.subr.bf16.mxu0 0
        %1554 = vmatpush2.bf16.xpose.msra.mxu0 0
        %1555 = vmatprep.subr.bf16.mxu0 0
        %1556 = vmatpush2.bf16.xpose.msra.mxu0 0
        %1557 = vmatprep.subr.bf16.mxu0 0
        %1558 = vmatpush2.bf16.xpose.msra.mxu0 0
        %1559 = vmatprep.subr.bf16.mxu0 0
        %1560 = vmatpush2.bf16.xpose.msra.mxu0 0
        %1561 = vmatprep.subr.bf16.mxu0 0
        %1562 = vmatpush2.bf16.xpose.msra.mxu0 0
        %1563 = vmatprep.mubr.bf16.mxu0 0
        %1564 = vmatmul.mubr.bf16.gmra.mxu0 %v1526
        %v1565 = vpop.f32.mrf.mxu0
        %v1566 = vadd.f32 0.0, %v1565
        %v1567 = vpop.f32.mrf.mxu0
        %v1568 = vpop.f32.mrf.mxu0
        %v1569 = vpop.f32.mrf.mxu0
        %1570 = vdwg.mxu0
        %v1572 = vsel %vm1432, %v1131, 0
        %v1575 = vsel %vm1432, %v1281, 0
        %1577 = vmatprep.subr.bf16.mxu0 0
        %1578 = vmatpush1.bf16.xpose.msra.mxu0 0
        %1579 = vmatprep.subr.bf16.mxu0 0
        %1580 = vmatpush1.bf16.xpose.msra.mxu0 0
        %1581 = vmatprep.subr.bf16.mxu0 0
        %1582 = vmatpush1.bf16.xpose.msra.mxu0 0
        %1583 = vmatprep.subr.bf16.mxu0 0
        %1584 = vmatpush1.bf16.xpose.msra.mxu0 0
        %1585 = vmatprep.subr.bf16.mxu0 0
        %1586 = vmatpush1.bf16.xpose.msra.mxu0 0
        %1587 = vmatprep.subr.bf16.mxu0 0
        %1588 = vmatpush1.bf16.xpose.msra.mxu0 0
        %1589 = vmatprep.subr.bf16.mxu0 0
        %1590 = vmatpush1.bf16.xpose.msra.mxu0 0
        %1591 = vmatprep.subr.bf16.mxu0 0
        %1592 = vmatpush1.bf16.xpose.msra.mxu0 %v1575
        %1593 = vmatprep.subr.bf16.mxu0 0
        %1594 = vmatpush2.bf16.xpose.msra.mxu0 0
        %1595 = vmatprep.subr.bf16.mxu0 0
        %1596 = vmatpush2.bf16.xpose.msra.mxu0 0
        %1597 = vmatprep.subr.bf16.mxu0 0
        %1598 = vmatpush2.bf16.xpose.msra.mxu0 0
        %1599 = vmatprep.subr.bf16.mxu0 0
        %1600 = vmatpush2.bf16.xpose.msra.mxu0 0
        %1601 = vmatprep.subr.bf16.mxu0 0
        %1602 = vmatpush2.bf16.xpose.msra.mxu0 0
        %1603 = vmatprep.subr.bf16.mxu0 0
        %1604 = vmatpush2.bf16.xpose.msra.mxu0 0
        %1605 = vmatprep.subr.bf16.mxu0 0
        %1606 = vmatpush2.bf16.xpose.msra.mxu0 0
        %1607 = vmatprep.subr.bf16.mxu0 0
        %1608 = vmatpush2.bf16.xpose.msra.mxu0 0
        %1609 = vmatprep.mubr.bf16.mxu0 0
        %1610 = vmatmul.mubr.bf16.gmra.mxu0 %v1572
        %v1611 = vpop.f32.mrf.mxu0
        %v1612 = vadd.f32 0.0, %v1611
        %v1613 = vpop.f32.mrf.mxu0
        %v1614 = vpop.f32.mrf.mxu0
        %v1615 = vpop.f32.mrf.mxu0
        %1616 = vdwg.mxu0
        %v1617 = vsel %vm1432, %v1474, -inf
        %1618 = vmax.xlane.f32.xlu0 %v1617
        %v1619 = vpop.xlane.xlu0 %1618
        %v1620 = vsel %vm1432, %v1520, -inf
        %1621 = vmax.xlane.f32.xlu0 %v1620
        %v1622 = vpop.xlane.xlu0 %1621
        %v1623 = vsel %vm1432, %v1566, -inf
        %1624 = vmax.xlane.f32.xlu0 %v1623
        %v1625 = vpop.xlane.xlu0 %1624
        %v1626 = vsel %vm1432, %v1612, -inf
        %1627 = vmax.xlane.f32.xlu0 %v1626
        %v1628 = vpop.xlane.xlu0 %1627
        %v1629 = vsub.f32 %v1474, %v1619
        %v1630 = vsub.f32 %v1520, %v1622
        %v1631 = vsub.f32 %v1566, %v1625
        %v1632 = vsub.f32 %v1612, %v1628
        %v1633 = vmul.f32 %v1629, 1.442695
        %v1634 = vpow.pop %v1633
        %v1635 = vmul.f32 %v1630, 1.442695
        %v1636 = vpow.pop %v1635
        %v1637 = vmul.f32 %v1631, 1.442695
        %v1638 = vpow.pop %v1637
        %v1639 = vmul.f32 %v1632, 1.442695
        %v1640 = vpow.pop %v1639
        %v1641 = vsel %vm1432, %v1634, 0.0
        %1642 = vadd.xlane.f32.xlu0 %v1641
        %v1643 = vpop.xlane.xlu0 %1642
        %v1644 = vsel %vm1432, %v1636, 0.0
        %1645 = vadd.xlane.f32.xlu0 %v1644
        %v1646 = vpop.xlane.xlu0 %1645
        %v1647 = vsel %vm1432, %v1638, 0.0
        %1648 = vadd.xlane.f32.xlu0 %v1647
        %v1649 = vpop.xlane.xlu0 %1648
        %v1650 = vsel %vm1432, %v1640, 0.0
        %1651 = vadd.xlane.f32.xlu0 %v1650
        %v1652 = vpop.xlane.xlu0 %1651
        %v1653 = vrcp.pop %v1643
        %v1654 = vrcp.pop %v1646
        %v1655 = vrcp.pop %v1649
        %v1656 = vrcp.pop %v1652
        %v1657 = vmul.f32 %v1634, %v1653
        %v1658 = vmul.f32 %v1636, %v1654
        %v1659 = vmul.f32 %v1638, %v1655
        %v1660 = vmul.f32 %v1640, %v1656
        %v1661 = vpack.c.bf16 %v1657, %v1657
        %v1662 = vpack.c.bf16 %v1658, %v1658
        %v1663 = vpack.c.bf16 %v1659, %v1659
        %v1664 = vpack.c.bf16 %v1660, %v1660
        %v1666 = vsel %vm1432, %v1661, 0
        %vm1668 = vcmask 1043456
        %v1670 = vsel %vm1668, %v1428, 0
        %1672 = vmatprep.subr.bf16.mxu0 0
        %1673 = vmatpush1.bf16.msra.mxu0 0
        %1674 = vmatprep.subr.bf16.mxu0 0
        %1675 = vmatpush1.bf16.msra.mxu0 0
        %1676 = vmatprep.subr.bf16.mxu0 0
        %1677 = vmatpush1.bf16.msra.mxu0 0
        %1678 = vmatprep.subr.bf16.mxu0 0
        %1679 = vmatpush1.bf16.msra.mxu0 0
        %1680 = vmatprep.subr.bf16.mxu0 0
        %1681 = vmatpush1.bf16.msra.mxu0 0
        %1682 = vmatprep.subr.bf16.mxu0 0
        %1683 = vmatpush1.bf16.msra.mxu0 0
        %1684 = vmatprep.subr.bf16.mxu0 0
        %1685 = vmatpush1.bf16.msra.mxu0 0
        %1686 = vmatprep.subr.bf16.mxu0 0
        %1687 = vmatpush1.bf16.msra.mxu0 %v1670
        %1688 = vmatprep.subr.bf16.mxu0 0
        %1689 = vmatpush2.bf16.msra.mxu0 0
        %1690 = vmatprep.subr.bf16.mxu0 0
        %1691 = vmatpush2.bf16.msra.mxu0 0
        %1692 = vmatprep.subr.bf16.mxu0 0
        %1693 = vmatpush2.bf16.msra.mxu0 0
        %1694 = vmatprep.subr.bf16.mxu0 0
        %1695 = vmatpush2.bf16.msra.mxu0 0
        %1696 = vmatprep.subr.bf16.mxu0 0
        %1697 = vmatpush2.bf16.msra.mxu0 0
        %1698 = vmatprep.subr.bf16.mxu0 0
        %1699 = vmatpush2.bf16.msra.mxu0 0
        %1700 = vmatprep.subr.bf16.mxu0 0
        %1701 = vmatpush2.bf16.msra.mxu0 0
        %1702 = vmatprep.subr.bf16.mxu0 0
        %1703 = vmatpush2.bf16.msra.mxu0 0
        %1704 = vmatprep.mubr.bf16.mxu0 0
        %1705 = vmatmul.mubr.bf16.gmra.mxu0 %v1666
        %v1706 = vpop.f32.mrf.mxu0
        %v1707 = vadd.f32 0.0, %v1706
        %v1708 = vpop.f32.mrf.mxu0
        %v1709 = vpop.f32.mrf.mxu0
        %v1710 = vpop.f32.mrf.mxu0
        %1711 = vdwg.mxu0
        %v1713 = vsel %vm1432, %v1662, 0
        %v1716 = vsel %vm1668, %v1429, 0
        %1718 = vmatprep.subr.bf16.mxu0 0
        %1719 = vmatpush1.bf16.msra.mxu0 0
        %1720 = vmatprep.subr.bf16.mxu0 0
        %1721 = vmatpush1.bf16.msra.mxu0 0
        %1722 = vmatprep.subr.bf16.mxu0 0
        %1723 = vmatpush1.bf16.msra.mxu0 0
        %1724 = vmatprep.subr.bf16.mxu0 0
        %1725 = vmatpush1.bf16.msra.mxu0 0
        %1726 = vmatprep.subr.bf16.mxu0 0
        %1727 = vmatpush1.bf16.msra.mxu0 0
        %1728 = vmatprep.subr.bf16.mxu0 0
        %1729 = vmatpush1.bf16.msra.mxu0 0
        %1730 = vmatprep.subr.bf16.mxu0 0
        %1731 = vmatpush1.bf16.msra.mxu0 0
        %1732 = vmatprep.subr.bf16.mxu0 0
        %1733 = vmatpush1.bf16.msra.mxu0 %v1716
        %1734 = vmatprep.subr.bf16.mxu0 0
        %1735 = vmatpush2.bf16.msra.mxu0 0
        %1736 = vmatprep.subr.bf16.mxu0 0
        %1737 = vmatpush2.bf16.msra.mxu0 0
        %1738 = vmatprep.subr.bf16.mxu0 0
        %1739 = vmatpush2.bf16.msra.mxu0 0
        %1740 = vmatprep.subr.bf16.mxu0 0
        %1741 = vmatpush2.bf16.msra.mxu0 0
        %1742 = vmatprep.subr.bf16.mxu0 0
        %1743 = vmatpush2.bf16.msra.mxu0 0
        %1744 = vmatprep.subr.bf16.mxu0 0
        %1745 = vmatpush2.bf16.msra.mxu0 0
        %1746 = vmatprep.subr.bf16.mxu0 0
        %1747 = vmatpush2.bf16.msra.mxu0 0
        %1748 = vmatprep.subr.bf16.mxu0 0
        %1749 = vmatpush2.bf16.msra.mxu0 0
        %1750 = vmatprep.mubr.bf16.mxu0 0
        %1751 = vmatmul.mubr.bf16.gmra.mxu0 %v1713
        %v1752 = vpop.f32.mrf.mxu0
        %v1753 = vadd.f32 0.0, %v1752
        %v1754 = vpop.f32.mrf.mxu0
        %v1755 = vpop.f32.mrf.mxu0
        %v1756 = vpop.f32.mrf.mxu0
        %1757 = vdwg.mxu0
        %v1759 = vsel %vm1432, %v1663, 0
        %v1762 = vsel %vm1668, %v1430, 0
        %1764 = vmatprep.subr.bf16.mxu0 0
        %1765 = vmatpush1.bf16.msra.mxu0 0
        %1766 = vmatprep.subr.bf16.mxu0 0
        %1767 = vmatpush1.bf16.msra.mxu0 0
        %1768 = vmatprep.subr.bf16.mxu0 0
        %1769 = vmatpush1.bf16.msra.mxu0 0
        %1770 = vmatprep.subr.bf16.mxu0 0
        %1771 = vmatpush1.bf16.msra.mxu0 0
        %1772 = vmatprep.subr.bf16.mxu0 0
        %1773 = vmatpush1.bf16.msra.mxu0 0
        %1774 = vmatprep.subr.bf16.mxu0 0
        %1775 = vmatpush1.bf16.msra.mxu0 0
        %1776 = vmatprep.subr.bf16.mxu0 0
        %1777 = vmatpush1.bf16.msra.mxu0 0
        %1778 = vmatprep.subr.bf16.mxu0 0
        %1779 = vmatpush1.bf16.msra.mxu0 %v1762
        %1780 = vmatprep.subr.bf16.mxu0 0
        %1781 = vmatpush2.bf16.msra.mxu0 0
        %1782 = vmatprep.subr.bf16.mxu0 0
        %1783 = vmatpush2.bf16.msra.mxu0 0
        %1784 = vmatprep.subr.bf16.mxu0 0
        %1785 = vmatpush2.bf16.msra.mxu0 0
        %1786 = vmatprep.subr.bf16.mxu0 0
        %1787 = vmatpush2.bf16.msra.mxu0 0
        %1788 = vmatprep.subr.bf16.mxu0 0
        %1789 = vmatpush2.bf16.msra.mxu0 0
        %1790 = vmatprep.subr.bf16.mxu0 0
        %1791 = vmatpush2.bf16.msra.mxu0 0
        %1792 = vmatprep.subr.bf16.mxu0 0
        %1793 = vmatpush2.bf16.msra.mxu0 0
        %1794 = vmatprep.subr.bf16.mxu0 0
        %1795 = vmatpush2.bf16.msra.mxu0 0
        %1796 = vmatprep.mubr.bf16.mxu0 0
        %1797 = vmatmul.mubr.bf16.gmra.mxu0 %v1759
        %v1798 = vpop.f32.mrf.mxu0
        %v1799 = vadd.f32 0.0, %v1798
        %v1800 = vpop.f32.mrf.mxu0
        %v1801 = vpop.f32.mrf.mxu0
        %v1802 = vpop.f32.mrf.mxu0
        %1803 = vdwg.mxu0
        %v1805 = vsel %vm1432, %v1664, 0
        %v1808 = vsel %vm1668, %v1431, 0
        %1810 = vmatprep.subr.bf16.mxu0 0
        %1811 = vmatpush1.bf16.msra.mxu0 0
        %1812 = vmatprep.subr.bf16.mxu0 0
        %1813 = vmatpush1.bf16.msra.mxu0 0
        %1814 = vmatprep.subr.bf16.mxu0 0
        %1815 = vmatpush1.bf16.msra.mxu0 0
        %1816 = vmatprep.subr.bf16.mxu0 0
        %1817 = vmatpush1.bf16.msra.mxu0 0
        %1818 = vmatprep.subr.bf16.mxu0 0
        %1819 = vmatpush1.bf16.msra.mxu0 0
        %1820 = vmatprep.subr.bf16.mxu0 0
        %1821 = vmatpush1.bf16.msra.mxu0 0
        %1822 = vmatprep.subr.bf16.mxu0 0
        %1823 = vmatpush1.bf16.msra.mxu0 0
        %1824 = vmatprep.subr.bf16.mxu0 0
        %1825 = vmatpush1.bf16.msra.mxu0 %v1808
        %1826 = vmatprep.subr.bf16.mxu0 0
        %1827 = vmatpush2.bf16.msra.mxu0 0
        %1828 = vmatprep.subr.bf16.mxu0 0
        %1829 = vmatpush2.bf16.msra.mxu0 0
        %1830 = vmatprep.subr.bf16.mxu0 0
        %1831 = vmatpush2.bf16.msra.mxu0 0
        %1832 = vmatprep.subr.bf16.mxu0 0
        %1833 = vmatpush2.bf16.msra.mxu0 0
        %1834 = vmatprep.subr.bf16.mxu0 0
        %1835 = vmatpush2.bf16.msra.mxu0 0
        %1836 = vmatprep.subr.bf16.mxu0 0
        %1837 = vmatpush2.bf16.msra.mxu0 0
        %1838 = vmatprep.subr.bf16.mxu0 0
        %1839 = vmatpush2.bf16.msra.mxu0 0
        %1840 = vmatprep.subr.bf16.mxu0 0
        %1841 = vmatpush2.bf16.msra.mxu0 0
        %1842 = vmatprep.mubr.bf16.mxu0 0
        %1843 = vmatmul.mubr.bf16.gmra.mxu0 %v1805
        %v1844 = vpop.f32.mrf.mxu0
        %v1845 = vadd.f32 0.0, %v1844
        %v1846 = vpop.f32.mrf.mxu0
        %v1847 = vpop.f32.mrf.mxu0
        %v1848 = vpop.f32.mrf.mxu0
        %1849 = vdwg.mxu0
        %v1850 = vcombine.low %v1707, %v1799
        %v1851 = vcombine.high %v1707, %v1799
        %v1853 = vunpack.c.l.s4 1983009808
        %v1854 = vunpack.c.0.s8 %v1853
        %v1855 = vlaneseq
        %v1856 = vshrl.u32 %v1855, 7
        %v1857 = vsub.s32 %v1854, %v1856
        %v1858 = vrot.slane %v1850, %v1857
        %v1860 = vunpack.c.l.s4 1983009808
        %v1861 = vunpack.c.0.s8 %v1860
        %v1862 = vlaneseq
        %v1863 = vshrl.u32 %v1862, 7
        %v1864 = vsub.s32 %v1861, %v1863
        %v1865 = vrot.slane %v1851, %v1864
        %v1866 = vcombine.low %v1753, %v1845
        %v1867 = vcombine.high %v1753, %v1845
        %v1869 = vunpack.c.l.s4 1983009808
        %v1870 = vunpack.c.0.s8 %v1869
        %v1871 = vlaneseq
        %v1872 = vshrl.u32 %v1871, 7
        %v1873 = vsub.s32 %v1870, %v1872
        %v1874 = vrot.slane %v1866, %v1873
        %v1876 = vunpack.c.l.s4 1983009808
        %v1877 = vunpack.c.0.s8 %v1876
        %v1878 = vlaneseq
        %v1879 = vshrl.u32 %v1878, 7
        %v1880 = vsub.s32 %v1877, %v1879
        %v1881 = vrot.slane %v1867, %v1880
        %v1882 = vcombine.low %v1858, %v1874
        %v1883 = vcombine.high %v1858, %v1874
        %v1885 = vunpack.c.l.s4 1934713408
        %v1886 = vunpack.c.0.s8 %v1885
        %v1887 = vlaneseq
        %v1888 = vshrl.u32 %v1887, 7
        %v1889 = vsub.s32 %v1886, %v1888
        %v1890 = vrot.slane %v1882, %v1889
        %v1892 = vunpack.c.l.s4 1934713408
        %v1893 = vunpack.c.0.s8 %v1892
        %v1894 = vlaneseq
        %v1895 = vshrl.u32 %v1894, 7
        %v1896 = vsub.s32 %v1893, %v1895
        %v1897 = vrot.slane %v1883, %v1896
        %v1898 = vcombine.low %v1865, %v1881
        %v1899 = vcombine.high %v1865, %v1881
        %v1901 = vunpack.c.l.s4 1934713408
        %v1902 = vunpack.c.0.s8 %v1901
        %v1903 = vlaneseq
        %v1904 = vshrl.u32 %v1903, 7
        %v1905 = vsub.s32 %v1902, %v1904
        %v1906 = vrot.slane %v1898, %v1905
        %v1908 = vunpack.c.l.s4 1934713408
        %v1909 = vunpack.c.0.s8 %v1908
        %v1910 = vlaneseq
        %v1911 = vshrl.u32 %v1910, 7
        %v1912 = vsub.s32 %v1909, %v1911
        %v1913 = vrot.slane %v1899, %v1912
        %v1914 = vcombine.high %v1890, 0.0
        %v1915 = vcombine.high %v1897, 0.0
        %v1916 = vcombine.high %v1906, 0.0
        %v1917 = vcombine.high %v1913, 0.0
        %v1918 = vcombine.low %v1890, %v1897
        %v1920 = vunpack.c.l.s4 1983009808
        %v1921 = vunpack.c.0.s8 %v1920
        %v1922 = vlaneseq
        %v1923 = vshrl.u32 %v1922, 7
        %v1924 = vsub.s32 %v1921, %v1923
        %v1925 = vrot.slane %v1918, %v1924
        %v1926 = vcombine.low %v1914, %v1915
        %v1928 = vunpack.c.l.s4 1983009808
        %v1929 = vunpack.c.0.s8 %v1928
        %v1930 = vlaneseq
        %v1931 = vshrl.u32 %v1930, 7
        %v1932 = vsub.s32 %v1929, %v1931
        %v1933 = vrot.slane %v1926, %v1932
        %v1934 = vcombine.low %v1906, %v1913
        %v1936 = vunpack.c.l.s4 1983009808
        %v1937 = vunpack.c.0.s8 %v1936
        %v1938 = vlaneseq
        %v1939 = vshrl.u32 %v1938, 7
        %v1940 = vsub.s32 %v1937, %v1939
        %v1941 = vrot.slane %v1934, %v1940
        %v1942 = vcombine.low %v1916, %v1917
        %v1944 = vunpack.c.l.s4 1983009808
        %v1945 = vunpack.c.0.s8 %v1944
        %v1946 = vlaneseq
        %v1947 = vshrl.u32 %v1946, 7
        %v1948 = vsub.s32 %v1945, %v1947
        %v1949 = vrot.slane %v1942, %v1948
        %v1950 = vcombine.low %v1925, %v1933
        %v1951 = vcombine.high %v1925, %v1933
        %v1953 = vunpack.c.l.s4 1934713408
        %v1954 = vunpack.c.0.s8 %v1953
        %v1955 = vlaneseq
        %v1956 = vshrl.u32 %v1955, 7
        %v1957 = vsub.s32 %v1954, %v1956
        %v1958 = vrot.slane %v1950, %v1957
        %v1960 = vunpack.c.l.s4 1934713408
        %v1961 = vunpack.c.0.s8 %v1960
        %v1962 = vlaneseq
        %v1963 = vshrl.u32 %v1962, 7
        %v1964 = vsub.s32 %v1961, %v1963
        %v1965 = vrot.slane %v1951, %v1964
        %v1966 = vcombine.low %v1941, %v1949
        %v1967 = vcombine.high %v1941, %v1949
        %v1969 = vunpack.c.l.s4 1934713408
        %v1970 = vunpack.c.0.s8 %v1969
        %v1971 = vlaneseq
        %v1972 = vshrl.u32 %v1971, 7
        %v1973 = vsub.s32 %v1970, %v1972
        %v1974 = vrot.slane %v1966, %v1973
        %v1976 = vunpack.c.l.s4 1934713408
        %v1977 = vunpack.c.0.s8 %v1976
        %v1978 = vlaneseq
        %v1979 = vshrl.u32 %v1978, 7
        %v1980 = vsub.s32 %v1977, %v1979
        %v1981 = vrot.slane %v1967, %v1980
        %v1982 = vcombine.low %v1958, %v1974
        %v1983 = vcombine.high %v1958, %v1974
        %v1984 = vcombine.low %v1965, %v1981
        %v1985 = vcombine.high %v1965, %v1981
        %1987 = vrot.lane.b32.xlu0 %v1983, 8
        %v1988 = vpop.permute.xlu0 %1987
        %1991 = vrot.lane.b32.xlu0 %v1984, 16
        %v1992 = vpop.permute.xlu0 %1991
        %1995 = vrot.lane.b32.xlu0 %v1985, 24
        %v1996 = vpop.permute.xlu0 %1995
        %v1998 = vsel %vm1432, %v1982, %v1988
        %vm1999 = vcmask 130048
        %v2000 = vsel %vm1999, %v1998, %v1992
        %vm2001 = vcmask 195584
        %v2002 = vsel %vm2001, %v2000, %v1996
        %v2003 = vpack.c.bf16 %v2002, %v2002
        %v2004 = vld [vmem:[%s628] sm:$0xf]
        %v2005 = vld [vmem:[%s628 + $0x4] sm:$0xf]
        %v2006 = vld [vmem:[%s628 + $0x8] sm:$0xf]
        %v2007 = vld [vmem:[%s628 + $0xc] sm:$0xf]
        %v2008 = vld [vmem:[%s752] sm:$0x1]
        %v2010 = vlaneseq
        %v2011 = vshrl.u32 %v2010, 7
        %v2012 = vsub.s32 0, %v2011
        %v2013 = vrot.slane %v2008, %v2012
        %v2019 = vunpack.c.l.b16 %v2004
        %v2020 = vunpack.c.l.b16 %v2005
        %v2021 = vunpack.c.l.b16 %v2006
        %v2022 = vunpack.c.l.b16 %v2007
        %v2023 = vpack.c.b16 %v2020, %v2019
        %v2024 = vpack.c.b16 %v2022, %v2021
        %v2028 = vsel %vm781, %v2003, 0
        %2030 = vmatprep.subr.bf16.mxu0 0
        %2031 = vmatpush1.bf16.msra.mxu0 0
        %2032 = vmatprep.subr.bf16.mxu0 0
        %2033 = vmatpush1.bf16.msra.mxu0 0
        %2034 = vmatprep.subr.bf16.mxu0 0
        %2035 = vmatpush1.bf16.msra.mxu0 0
        %2036 = vmatprep.subr.bf16.mxu0 0
        %2037 = vmatpush1.bf16.msra.mxu0 0
        %2038 = vmatprep.subr.bf16.mxu0 0
        %2039 = vmatpush1.bf16.msra.mxu0 0
        %2040 = vmatprep.subr.bf16.mxu0 0
        %2041 = vmatpush1.bf16.msra.mxu0 0
        %2042 = vmatprep.subr.bf16.mxu0 0
        %2043 = vmatpush1.bf16.msra.mxu0 %v2024
        %2044 = vmatprep.subr.bf16.mxu0 0
        %2045 = vmatpush1.bf16.msra.mxu0 %v2023
        %2046 = vmatprep.subr.bf16.mxu0 0
        %2047 = vmatpush2.bf16.msra.mxu0 0
        %2048 = vmatprep.subr.bf16.mxu0 0
        %2049 = vmatpush2.bf16.msra.mxu0 0
        %2050 = vmatprep.subr.bf16.mxu0 0
        %2051 = vmatpush2.bf16.msra.mxu0 0
        %2052 = vmatprep.subr.bf16.mxu0 0
        %2053 = vmatpush2.bf16.msra.mxu0 0
        %2054 = vmatprep.subr.bf16.mxu0 0
        %2055 = vmatpush2.bf16.msra.mxu0 0
        %2056 = vmatprep.subr.bf16.mxu0 0
        %2057 = vmatpush2.bf16.msra.mxu0 0
        %2058 = vmatprep.subr.bf16.mxu0 0
        %2059 = vmatpush2.bf16.msra.mxu0 0
        %2060 = vmatprep.subr.bf16.mxu0 0
        %2061 = vmatpush2.bf16.msra.mxu0 0
        %2062 = vmatprep.mubr.bf16.mxu0 0
        %2063 = vmatmul.mubr.bf16.gmra.mxu0 %v2028
        %v2064 = vpop.f32.mrf.mxu0
        %v2065 = vadd.f32 %v2013, %v2064
        %v2066 = vpop.f32.mrf.mxu0
        %v2067 = vpop.f32.mrf.mxu0
        %v2068 = vpop.f32.mrf.mxu0
        %2069 = vdwg.mxu0
        %v2070 = vadd.f32 %v778, %v2065
        %v2071 = vld [vmem:[%s755] sm:$0x1]
        %v2072 = vld [vmem:[%s758] sm:$0x1]
        %v2073 = vsel %vm781, %v2070, 0.0
        %2074 = vadd.xlane.f32.xlu0 %v2073
        %v2075 = vpop.xlane.xlu0 %2074
        %v2076 = vmul.f32 %v2075, %v785
        %v2077 = vsub.f32 %v2070, %v2076
        %v2078 = vmul.f32 %v2077, %v2077
        %v2079 = vsel %vm781, %v2078, 0.0
        %2080 = vadd.xlane.f32.xlu0 %v2079
        %v2081 = vpop.xlane.xlu0 %2080
        %v2082 = vmul.f32 %v2081, %v785
        %v2083 = vadd.f32 %v2082, 1e-05
        %v2084 = vrsqrt.pop %v2083
        %v2085 = vmul.f32 %v2077, %v2084
        %v2087 = vlaneseq
        %v2088 = vshrl.u32 %v2087, 7
        %v2089 = vsub.s32 0, %v2088
        %v2090 = vrot.slane %v2071, %v2089
        %v2092 = vmul.f32 %v2085, %v2090
        %v2094 = vlaneseq
        %v2095 = vshrl.u32 %v2094, 7
        %v2096 = vsub.s32 0, %v2095
        %v2097 = vrot.slane %v2072, %v2096
        %v2099 = vadd.f32 %v2092, %v2097
        %v2100 = vpack.c.bf16 %v2099, %v2099
        %v2101 = vld [vmem:[%s637] sm:$0xf]
        %v2102 = vld [vmem:[%s637 + $0x4] sm:$0xf]
        %v2103 = vld [vmem:[%s637 + $0x8] sm:$0xf]
        %v2104 = vld [vmem:[%s637 + $0xc] sm:$0xf]
        %v2105 = vld [vmem:[%s761] sm:$0x1]
        %v2107 = vlaneseq
        %v2108 = vshrl.u32 %v2107, 7
        %v2109 = vsub.s32 0, %v2108
        %v2110 = vrot.slane %v2105, %v2109
        %v2116 = vunpack.c.l.b16 %v2101
        %v2117 = vunpack.c.l.b16 %v2102
        %v2118 = vunpack.c.l.b16 %v2103
        %v2119 = vunpack.c.l.b16 %v2104
        %v2120 = vpack.c.b16 %v2117, %v2116
        %v2121 = vpack.c.b16 %v2119, %v2118
        %v2125 = vsel %vm781, %v2100, 0
        %2127 = vmatprep.subr.bf16.mxu0 0
        %2128 = vmatpush1.bf16.msra.mxu0 0
        %2129 = vmatprep.subr.bf16.mxu0 0
        %2130 = vmatpush1.bf16.msra.mxu0 0
        %2131 = vmatprep.subr.bf16.mxu0 0
        %2132 = vmatpush1.bf16.msra.mxu0 0
        %2133 = vmatprep.subr.bf16.mxu0 0
        %2134 = vmatpush1.bf16.msra.mxu0 0
        %2135 = vmatprep.subr.bf16.mxu0 0
        %2136 = vmatpush1.bf16.msra.mxu0 0
        %2137 = vmatprep.subr.bf16.mxu0 0
        %2138 = vmatpush1.bf16.msra.mxu0 0
        %2139 = vmatprep.subr.bf16.mxu0 0
        %2140 = vmatpush1.bf16.msra.mxu0 %v2121
        %2141 = vmatprep.subr.bf16.mxu0 0
        %2142 = vmatpush1.bf16.msra.mxu0 %v2120
        %2143 = vmatprep.subr.bf16.mxu0 0
        %2144 = vmatpush2.bf16.msra.mxu0 0
        %2145 = vmatprep.subr.bf16.mxu0 0
        %2146 = vmatpush2.bf16.msra.mxu0 0
        %2147 = vmatprep.subr.bf16.mxu0 0
        %2148 = vmatpush2.bf16.msra.mxu0 0
        %2149 = vmatprep.subr.bf16.mxu0 0
        %2150 = vmatpush2.bf16.msra.mxu0 0
        %2151 = vmatprep.subr.bf16.mxu0 0
        %2152 = vmatpush2.bf16.msra.mxu0 0
        %2153 = vmatprep.subr.bf16.mxu0 0
        %2154 = vmatpush2.bf16.msra.mxu0 0
        %2155 = vmatprep.subr.bf16.mxu0 0
        %2156 = vmatpush2.bf16.msra.mxu0 0
        %2157 = vmatprep.subr.bf16.mxu0 0
        %2158 = vmatpush2.bf16.msra.mxu0 0
        %2159 = vmatprep.mubr.bf16.mxu0 0
        %2160 = vmatmul.mubr.bf16.gmra.mxu0 %v2125
        %v2161 = vpop.f32.mrf.mxu0
        %v2162 = vadd.f32 %v2110, %v2161
        %v2163 = vpop.f32.mrf.mxu0
        %v2164 = vpop.f32.mrf.mxu0
        %v2165 = vpop.f32.mrf.mxu0
        %2166 = vdwg.mxu0
        %v2167 = vxor.u32 %v2162, 2147483648
        %v2168 = vmul.f32 %v2167, 1.442695
        %v2169 = vpow.pop %v2168
        %v2170 = vadd.f32 %v2169, 1.0
        %v2171 = vrcp.pop %v2170
        %v2172 = vmul.f32 1.0, %v2171
        %v2173 = vmul.f32 %v2162, %v2172
        %v2174 = vpack.c.bf16 %v2173, %v2173
        %v2175 = vld [vmem:[%s766] sm:$0xf]
        %v2176 = vld [vmem:[%s766 + $0x4] sm:$0xf]
        %v2177 = vld [vmem:[%s766 + $0x8] sm:$0xf]
        %v2178 = vld [vmem:[%s766 + $0xc] sm:$0xf]
        %v2179 = vld [vmem:[%s766 + $0x10] sm:$0xf]
        %v2180 = vld [vmem:[%s766 + $0x14] sm:$0xf]
        %v2181 = vld [vmem:[%s766 + $0x18] sm:$0xf]
        %v2182 = vld [vmem:[%s766 + $0x1c] sm:$0xf]
        %v2183 = vld [vmem:[%s769] sm:$0x1]
        %v2185 = vlaneseq
        %v2186 = vshrl.u32 %v2185, 7
        %v2187 = vsub.s32 0, %v2186
        %v2188 = vrot.slane %v2183, %v2187
        %v2198 = vunpack.c.l.b16 %v2175
        %v2199 = vunpack.c.l.b16 %v2176
        %v2200 = vunpack.c.l.b16 %v2177
        %v2201 = vunpack.c.l.b16 %v2178
        %v2202 = vunpack.c.l.b16 %v2179
        %v2203 = vunpack.c.l.b16 %v2180
        %v2204 = vunpack.c.l.b16 %v2181
        %v2205 = vunpack.c.l.b16 %v2182
        %v2206 = vpack.c.b16 %v2199, %v2198
        %v2207 = vpack.c.b16 %v2201, %v2200
        %v2208 = vpack.c.b16 %v2203, %v2202
        %v2209 = vpack.c.b16 %v2205, %v2204
        %vm2214 = vcmask 523264
        %v2216 = vsel %vm2214, %v2174, 0
        %2218 = vmatprep.subr.bf16.mxu0 0
        %2219 = vmatpush1.bf16.msra.mxu0 0
        %2220 = vmatprep.subr.bf16.mxu0 0
        %2221 = vmatpush1.bf16.msra.mxu0 0
        %2222 = vmatprep.subr.bf16.mxu0 0
        %2223 = vmatpush1.bf16.msra.mxu0 0
        %2224 = vmatprep.subr.bf16.mxu0 0
        %2225 = vmatpush1.bf16.msra.mxu0 0
        %2226 = vmatprep.subr.bf16.mxu0 0
        %2227 = vmatpush1.bf16.msra.mxu0 %v2209
        %2228 = vmatprep.subr.bf16.mxu0 0
        %2229 = vmatpush1.bf16.msra.mxu0 %v2208
        %2230 = vmatprep.subr.bf16.mxu0 0
        %2231 = vmatpush1.bf16.msra.mxu0 %v2207
        %2232 = vmatprep.subr.bf16.mxu0 0
        %2233 = vmatpush1.bf16.msra.mxu0 %v2206
        %2234 = vmatprep.subr.bf16.mxu0 0
        %2235 = vmatpush2.bf16.msra.mxu0 0
        %2236 = vmatprep.subr.bf16.mxu0 0
        %2237 = vmatpush2.bf16.msra.mxu0 0
        %2238 = vmatprep.subr.bf16.mxu0 0
        %2239 = vmatpush2.bf16.msra.mxu0 0
        %2240 = vmatprep.subr.bf16.mxu0 0
        %2241 = vmatpush2.bf16.msra.mxu0 0
        %2242 = vmatprep.subr.bf16.mxu0 0
        %2243 = vmatpush2.bf16.msra.mxu0 0
        %2244 = vmatprep.subr.bf16.mxu0 0
        %2245 = vmatpush2.bf16.msra.mxu0 0
        %2246 = vmatprep.subr.bf16.mxu0 0
        %2247 = vmatpush2.bf16.msra.mxu0 0
        %2248 = vmatprep.subr.bf16.mxu0 0
        %2249 = vmatpush2.bf16.msra.mxu0 0
        %2250 = vmatprep.mubr.bf16.mxu0 0
        %2251 = vmatmul.mubr.bf16.gmra.mxu0 %v2216
        %v2252 = vpop.f32.mrf.mxu0
        %v2253 = vadd.f32 %v2188, %v2252
        %v2254 = vpop.f32.mrf.mxu0
        %v2255 = vpop.f32.mrf.mxu0
        %v2256 = vpop.f32.mrf.mxu0
        %2257 = vdwg.mxu0
        %v2258 = vadd.f32 %v2070, %v2253
        %2259 = vst.msk [vmem:[#allocation2] sm:$0xff] %vm781, %v2258
        %p2260 = scmp.eq.s32.totalorder %s42, 1
        // Predicated region
        $region97: #{tpu_custom_call.1} parent=75 // pred_check
          %p2261 = pneg %p2260
        $region98: #{tpu_custom_call.1} parent=75 // pred_check_branch
          %2263 = sbr.rel (%p2261) target = $region100
        $region99: #{tpu_custom_call.1} parent=75 // pred_region
          %2264 = vst.msk [vmem:[%s732] sm:$0xff] %vm781, %v2258
        $region100: #{tpu_custom_call.1} parent=75 // pred_fallthru
          _
        %s2265 = sand.u32 %s421, 1
        %s2266 = scalar_lea.sflag [#allocation5], %s2265
        %s2267 = sand.u32 %s421, 1
        %s2268 = smul.addr %s2267, 8
        %s2269 = scalar_lea.vmem [#allocation11], %s2268
        // Predicated region
        $region101: #{tpu_custom_call.1} parent=75 // pred_check
          %p2270 = pneg %p431
        $region102: #{tpu_custom_call.1} parent=75 // pred_check_branch
          %2272 = sbr.rel (%p2270) target = $region104
        $region103: #{tpu_custom_call.1} parent=75 // pred_region
          %s2274 = ssub.s32 128, 128
          %2275 = vsyncadd %s2266, %s2274
          %s2276 = smul.addr %s41, 128
          %s2277 = scalar_lea.hbm %s14, %s2276
          %s2279 = sshll.u32 %s2269, 4
          %s2280 = int_to_ptr.vmem [resolvable:$true] %s2279
          %2282 = dma.vmem_to_hbm [thread:$0]  %s2280, 128, %s2277, %s2266
        $region104: #{tpu_custom_call.1} parent=75 // pred_fallthru
          _
      $region76: #{tpu_custom_call.1} parent=5 // pred_fallthru
        _
      %p2283 = scmp.le.s32.totalorder 2, %s32
      // Predicated region
      $region105: #{tpu_custom_call.1} parent=5 // pred_check
        %p2284 = pneg %p2283
      $region106: #{tpu_custom_call.1} parent=5 // pred_check_branch
        %2286 = sbr.rel (%p2284) target = $region108
      $region107: #{tpu_custom_call.1} parent=5 // pred_region
        %s2287 = ssub.s32 %s32, 2
        // Predicated region
        $region109: #{tpu_custom_call.1} parent=107 // pred_check
          %p2288 = pneg %p437
        $region110: #{tpu_custom_call.1} parent=107 // pred_check_branch
          %2290 = sbr.rel (%p2288) target = $region112
        $region111: #{tpu_custom_call.1} parent=107 // pred_region
          %s2291 = sand.u32 %s422, 1
          %s2292 = scalar_lea.sflag [#allocation5], %s2291
          %s2293 = sand.u32 %s422, 1
          %s2294 = smul.addr %s2293, 8
          %s2295 = scalar_lea.vmem [#allocation11], %s2294
          %2296 = dma.done %s2292, 128
        $region112: #{tpu_custom_call.1} parent=107 // pred_fallthru
          _
      $region108: #{tpu_custom_call.1} parent=5 // pred_fallthru
        _
    $region6: #{tpu_custom_call.1} parent=1 // loop_footer
      %s36 = sadd.s32 1, %s32
    $region7: #{tpu_custom_call.1} parent=1 // loop_footer_branch
      %31 = sbr.rel target = $region3
    $region8: #{tpu_custom_call.1} parent=1 // loop_exit
      _
    %2297 = vsyncpa [#allocation4], 1
    %s2298 = scalar_lea.sflag [#allocation4], 1
    %2299 = vsyncpa %s2298, 1
    %2300 = vsyncpa [#allocation7], 1
    %s2301 = scalar_lea.sflag [#allocation7], 1
    %2302 = vsyncpa %s2301, 1
    %2303 = vsyncpa [#allocation10], 1
    %s2304 = scalar_lea.sflag [#allocation10], 1
    %2305 = vsyncpa %s2304, 1
    %2306 = vsyncpa [#allocation5], 1
    %s2307 = scalar_lea.sflag [#allocation5], 1
    %2308 = vsyncpa %s2307, 1

</llo_original>
